<compile_context>
chip_gen: v7x
topology: tpu7x:2x2x1
jax: 0.10.0
libtpu: 0.0.40
codegen_flags: <defaults>
</compile_context>

<pallas_src>
import jax
import jax.numpy as jnp
from jax.experimental import pallas as pl
from jax.experimental.pallas import tpu as pltpu

# ---- configuration (trans_dim == hidden_dim so stacked GRU weights share a shape) ----
INPUT_DIM = 16        # configs['state_dim']
LINEAR_DIM = 32       # configs['linear_dim']
TRANS_DIM = 32        # configs['trans_dim']
HIDDEN_DIM = 32       # configs['hidden_dim']
NUM_RNN_LAYERS = 2    # configs['num_rnn_layers']
ACTION_DIM = 4        # configs['action_dim']
SEQ_LEN = 8           # rows of `state` == unbatched GRU sequence length

NEG_SLOPE = 0.01      # nn.LeakyReLU default negative_slope

assert NUM_RNN_LAYERS == 2  # TODO(synk): wavefront-fused recurrence written for 2 layers

# ---- packed parameter slab layout (one lane-dense (N_ROWS, 256) f32 array) ----
G = 3 * HIDDEN_DIM          # 96  (gate width)
G_OFF = 128                 # second half of the combo matmul starts at a lane-group boundary
PAD_OUT = 128               # lane-dense mu head width
SLAB_W = 256                # 2 x 128 lanes

R_W1 = 0                            # (INPUT_DIM, LINEAR_DIM)      cols 0:LINEAR_DIM
R_B1 = R_W1 + INPUT_DIM             # (1, LINEAR_DIM)
R_B2 = R_B1 + 1                     # (1, TRANS_DIM)
R_BIH0 = R_B2 + 1                   # (1, 3H)
R_BCMB = R_BIH0 + 1                 # (1, 256): [bih1 | 0 | bhh0 | 0]
R_BHH1 = R_BCMB + 1                 # (1, 3H)
R_BM = R_BHH1 + 1                   # (1, 128) zero-padded
R_W2 = 24                           # (LINEAR_DIM, TRANS_DIM)      (8-aligned)
R_WIH0 = R_W2 + LINEAR_DIM          # (TRANS_DIM, 3H)
R_WCMB = R_WIH0 + TRANS_DIM         # (H, 256): [wih1^T | 0 | whh0^T | 0]
R_WHH1 = R_WCMB + HIDDEN_DIM        # (H, 3H)
R_WM = R_WHH1 + HIDDEN_DIM          # (H, 128) zero-padded
N_ROWS = R_WM + HIDDEN_DIM          # 184


def _leaky_relu(x):
    return jnp.where(x > 0, x, NEG_SLOPE * x)


def rnn_actor_kernel(x_ref, p_ref, h0_ref, mu_ref, newh_ref, y_scr):
    H = HIDDEN_DIM
    H2 = 2 * H
    T = SEQ_LEN

    # ---- one-time loads: biases + loop-invariant recurrent weights (hoisted) ----
    b1 = p_ref[R_B1:R_B1 + 1, 0:LINEAR_DIM]
    b2 = p_ref[R_B2:R_B2 + 1, 0:TRANS_DIM]
    bih0 = p_ref[R_BIH0:R_BIH0 + 1, 0:G]
    bcmb = p_ref[R_BCMB:R_BCMB + 1, 0:SLAB_W]
    bhh1 = p_ref[R_BHH1:R_BHH1 + 1, 0:G]
    bm = p_ref[R_BM:R_BM + 1, 0:PAD_OUT]
    wcmb = p_ref[R_WCMB:R_WCMB + H, 0:SLAB_W]          # [wih1^T | 0 | whh0^T | 0]
    whh1 = p_ref[R_WHH1:R_WHH1 + H, 0:G]

    # ---- embedding MLP: Linear -> LeakyReLU -> Linear -> LeakyReLU ----
    e1 = _leaky_relu(
        jnp.dot(x_ref[...], p_ref[R_W1:R_W1 + INPUT_DIM, 0:LINEAR_DIM],
                preferred_element_type=jnp.float32) + b1)
    emb = _leaky_relu(
        jnp.dot(e1, p_ref[R_W2:R_W2 + LINEAR_DIM, 0:TRANS_DIM],
                preferred_element_type=jnp.float32) + b2)

    # ---- hoisted layer-0 input projection for ALL time steps: one (T,H)@(H,3H) matmul ----
    gi0_all = jnp.dot(emb, p_ref[R_WIH0:R_WIH0 + TRANS_DIM, 0:G],
                      preferred_element_type=jnp.float32) + bih0          # (T, 3H)

    h0 = h0_ref[0:1, :]
    h1 = h0_ref[1:2, :]

    def gru_cell(gi, gh, h_prev):
        # PyTorch gate order r, z, n; r and z share one fused sigmoid (single EUP push)
        rz = jax.nn.sigmoid(gi[:, 0:H2] + gh[:, 0:H2])
        r = rz[:, 0:H]
        z = rz[:, H:H2]
        n = jnp.tanh(gi[:, H2:G] + r * gh[:, H2:G])
        return (1.0 - z) * n + z * h_prev

    # prologue: gh0 for step 0 via the combo matmul (gi1 half discarded)
    combo = jnp.dot(h0, wcmb, preferred_element_type=jnp.float32) + bcmb   # (1, 256)
    gh0_next = combo[:, G_OFF:G_OFF + G]

    for t in range(T):  # fully unrolled: T is small and static
        # layer-1 recurrent projection: depends only on h1 from the previous step,
        # so it sits off the serial chain (scheduler overlaps it with the layer-0 cell).
        gh1 = jnp.dot(h1, whh1, preferred_element_type=jnp.float32) + bhh1

        # layer-0 cell: gi precomputed, gh prefetched by the previous combo matmul
        h0 = gru_cell(gi0_all[t:t + 1, :], gh0_next, h0)

        # wavefront-fused matmul: [gi1(t) | gh0(t+1)] = h0_t @ [wih1^T | whh0^T]
        combo = jnp.dot(h0, wcmb, preferred_element_type=jnp.float32) + bcmb
        gi1 = combo[:, 0:G]
        gh0_next = combo[:, G_OFF:G_OFF + G]

        # layer-1 cell; store y_t into VMEM scratch (off the critical path, frees vregs)
        h1 = gru_cell(gi1, gh1, h1)
        y_scr[t:t + 1, :] = h1

    # ---- continuous policy head: mu = tanh(Linear(y)), lane-dense (T, 128) output ----
    y = y_scr[...]                                                         # (T, H)
    mu_ref[...] = jnp.tanh(
        jnp.dot(y, p_ref[R_WM:R_WM + H, 0:PAD_OUT],
                preferred_element_type=jnp.float32) + bm)
    newh_ref[...] = jnp.concatenate([h0, h1], axis=0)                      # (L, H)


def prepare_params(p):
    """One-time conversion of PyTorch-layout params into a single lane-dense slab
    (cuts the kernel prologue from 14 tiny DMAs to 1 parameter DMA)."""
    H = HIDDEN_DIM
    wih_t = jnp.transpose(jnp.asarray(p["wih"], jnp.float32), (0, 2, 1))   # (L, H, 3H)
    whh_t = jnp.transpose(jnp.asarray(p["whh"], jnp.float32), (0, 2, 1))   # (L, H, 3H)

    slab = jnp.zeros((N_ROWS, SLAB_W), jnp.float32)

    def put(s, r, c, a):
        a = jnp.asarray(a, jnp.float32)
        return s.at[r:r + a.shape[0], c:c + a.shape[1]].set(a)

    slab = put(slab, R_W1, 0, jnp.asarray(p["w1"]).T)
    slab = put(slab, R_B1, 0, jnp.asarray(p["b1"]).reshape(1, -1))
    slab = put(slab, R_B2, 0, jnp.asarray(p["b2"]).reshape(1, -1))
    slab = put(slab, R_BIH0, 0, jnp.asarray(p["bih"][0]).reshape(1, -1))
    # combo bias: [bih1 | pad | bhh0 | pad] aligned so each half starts at a lane group
    slab = put(slab, R_BCMB, 0, jnp.asarray(p["bih"][1]).reshape(1, -1))
    slab = put(slab, R_BCMB, G_OFF, jnp.asarray(p["bhh"][0]).reshape(1, -1))
    slab = put(slab, R_BHH1, 0, jnp.asarray(p["bhh"][1]).reshape(1, -1))
    slab = put(slab, R_BM, 0, jnp.asarray(p["bm"]).reshape(1, -1))          # zero-padded to 128
    slab = put(slab, R_W2, 0, jnp.asarray(p["w2"]).T)
    slab = put(slab, R_WIH0, 0, wih_t[0])
    # combo weight: [wih1^T | pad | whh0^T | pad]
    slab = put(slab, R_WCMB, 0, wih_t[1])
    slab = put(slab, R_WCMB, G_OFF, whh_t[0])
    slab = put(slab, R_WHH1, 0, whh_t[1])
    slab = put(slab, R_WM, 0, jnp.asarray(p["wm"]).T)                       # zero-padded to 128

    return {
        "slab": slab,
        # std is state-independent: computed once here, not in the kernel
        "std": jnp.broadcast_to(jnp.exp(jnp.asarray(p["log_std"], jnp.float32)),
                                (SEQ_LEN, ACTION_DIM)),
    }


@jax.jit
def rnn_actor_forward(state, h0, prep):
    """Runs the RNNActor forward pass (continuous branch) in one Pallas TPU kernel."""
    vmem = pl.BlockSpec(memory_space=pltpu.MemorySpace.VMEM)
    out_shape = (
        jax.ShapeDtypeStruct((SEQ_LEN, PAD_OUT), jnp.float32),              # mu (lane-padded)
        jax.ShapeDtypeStruct((NUM_RNN_LAYERS, HIDDEN_DIM), jnp.float32),    # new_hidden
    )
    mu_pad, new_h = pl.pallas_call(
        rnn_actor_kernel,
        out_shape=out_shape,
        in_specs=[vmem, vmem, vmem],
        out_specs=(vmem, vmem),
        scratch_shapes=[pltpu.VMEM((SEQ_LEN, HIDDEN_DIM), jnp.float32)],
    )(state, prep["slab"], h0)
    return mu_pad[:, :ACTION_DIM], prep["std"], new_h


# ---------------- pure-JAX reference (for correctness check) ----------------
def reference_forward(state, h0, p):
    e1 = _leaky_relu(state @ p["w1"].T + p["b1"])
    e2 = _leaky_relu(e1 @ p["w2"].T + p["b2"])
    H = HIDDEN_DIM
    h = h0
    ys = []
    for t in range(SEQ_LEN):
        x_in = e2[t]
        new_h = []
        for l in range(NUM_RNN_LAYERS):
            gi = x_in @ p["wih"][l].T + p["bih"][l]
            gh = h[l] @ p["whh"][l].T + p["bhh"][l]
            r = jax.nn.sigmoid(gi[0:H] + gh[0:H])
            z = jax.nn.sigmoid(gi[H:2 * H] + gh[H:2 * H])
            n = jnp.tanh(gi[2 * H:3 * H] + r * gh[2 * H:3 * H])
            h_new = (1.0 - z) * n + z * h[l]
            new_h.append(h_new)
            x_in = h_new
        h = jnp.stack(new_h)
        ys.append(x_in)
    y = jnp.stack(ys)
    mu = jnp.tanh(y @ p["wm"].T + p["bm"])
    std = jnp.broadcast_to(jnp.exp(p["log_std"]), mu.shape)
    return mu, std, h


def init_params(key):
    ks = jax.random.split(key, 8)
    scale = 0.1
    p = {
        # embedding (PyTorch Linear orientation: (out, in))
        "w1": scale * jax.random.normal(ks[0], (LINEAR_DIM, INPUT_DIM), jnp.float32),
        "b1": jnp.zeros((LINEAR_DIM,), jnp.float32),
        "w2": scale * jax.random.normal(ks[1], (TRANS_DIM, LINEAR_DIM), jnp.float32),
        "b2": jnp.zeros((TRANS_DIM,), jnp.float32),
        # GRU: per layer weight_ih (3H, in), weight_hh (3H, H); trans_dim == hidden_dim
        "wih": scale * jax.random.normal(ks[2], (NUM_RNN_LAYERS, 3 * HIDDEN_DIM, HIDDEN_DIM), jnp.float32),
        "whh": scale * jax.random.normal(ks[3], (NUM_RNN_LAYERS, 3 * HIDDEN_DIM, HIDDEN_DIM), jnp.float32),
        "bih": scale * jax.random.normal(ks[4], (NUM_RNN_LAYERS, 3 * HIDDEN_DIM), jnp.float32),
        "bhh": scale * jax.random.normal(ks[5], (NUM_RNN_LAYERS, 3 * HIDDEN_DIM), jnp.float32),
        # continuous head
        "wm": scale * jax.random.normal(ks[6], (ACTION_DIM, HIDDEN_DIM), jnp.float32),
        "bm": jnp.zeros((ACTION_DIM,), jnp.float32),
        "log_std": -0.5 * jnp.ones((ACTION_DIM,), jnp.float32),  # nn.Parameter(-0.5 * ones)
    }
    # TODO(synk): PyTorch uses orthogonal init (layer_init); plain Gaussian init used here
    # since this is a synthetic kernel check, not a checkpoint load.
    # TODO(synk): discrete branch (is_continuous=False, Categorical over logits) not implemented.
    return p


if __name__ == "__main__":
    key = jax.random.PRNGKey(0)
    k_param, k_state, k_h = jax.random.split(key, 3)
    params = init_params(k_param)
    prep = prepare_params(params)   # one-time layout prep (hoisted out of the per-call path)

    # state: (seq_len, input_dim)  -- _format leaves a 2-D float tensor unchanged
    state = jax.random.normal(k_state, (SEQ_LEN, INPUT_DIM), jnp.float32)
    # hidden: (num_rnn_layers, hidden_dim) -- unbatched GRU hidden
    h0 = jax.random.normal(k_h, (NUM_RNN_LAYERS, HIDDEN_DIM), jnp.float32)

    mu, std, new_h = rnn_actor_forward(state, h0, prep)
    jax.block_until_ready((mu, std, new_h))

    mu_ref, std_ref, h_ref = reference_forward(state, h0, params)
    assert jnp.allclose(mu, mu_ref, atol=1e-4, rtol=1e-4)
    assert jnp.allclose(std, std_ref, atol=1e-5, rtol=1e-5)
    assert jnp.allclose(new_h, h_ref, atol=1e-4, rtol=1e-4)

    print("KERNEL_OK")
</pallas_src>

<mosaic_0001>
module attributes {stable_mosaic.version = 11 : i64} {
  func.func @rnn_actor_kernel(%arg0: memref<8x16xf32, #tpu.memory_space<vmem>>, %arg1: memref<184x256xf32, #tpu.memory_space<vmem>>, %arg2: memref<2x32xf32, #tpu.memory_space<vmem>>, %arg3: memref<8x128xf32, #tpu.memory_space<vmem>>, %arg4: memref<2x32xf32, #tpu.memory_space<vmem>>, %arg5: memref<8x32xf32, #tpu.memory_space<vmem>>) attributes {dimension_semantics = [], scalar_prefetch = 0 : i64, scratch_operands = 1 : i64, tpu.core_type = #tpu.core_type<tc>} {
    %c16 = arith.constant 16 : index
    %c0 = arith.constant 0 : index
    %0 = vector.load %arg1[%c16, %c0] : memref<184x256xf32, #tpu.memory_space<vmem>>, vector<1x32xf32>
    %c17 = arith.constant 17 : index
    %c0_0 = arith.constant 0 : index
    %1 = vector.load %arg1[%c17, %c0_0] : memref<184x256xf32, #tpu.memory_space<vmem>>, vector<1x32xf32>
    %c18 = arith.constant 18 : index
    %c0_1 = arith.constant 0 : index
    %2 = vector.load %arg1[%c18, %c0_1] : memref<184x256xf32, #tpu.memory_space<vmem>>, vector<1x96xf32>
    %c19 = arith.constant 19 : index
    %c0_2 = arith.constant 0 : index
    %3 = vector.load %arg1[%c19, %c0_2] : memref<184x256xf32, #tpu.memory_space<vmem>>, vector<1x256xf32>
    %c20 = arith.constant 20 : index
    %c0_3 = arith.constant 0 : index
    %4 = vector.load %arg1[%c20, %c0_3] : memref<184x256xf32, #tpu.memory_space<vmem>>, vector<1x96xf32>
    %c21 = arith.constant 21 : index
    %c0_4 = arith.constant 0 : index
    %5 = vector.load %arg1[%c21, %c0_4] : memref<184x256xf32, #tpu.memory_space<vmem>>, vector<1x128xf32>
    %c88 = arith.constant 88 : index
    %c0_5 = arith.constant 0 : index
    %6 = vector.load %arg1[%c88, %c0_5] : memref<184x256xf32, #tpu.memory_space<vmem>>, vector<32x256xf32>
    %c120 = arith.constant 120 : index
    %c0_6 = arith.constant 0 : index
    %7 = vector.load %arg1[%c120, %c0_6] : memref<184x256xf32, #tpu.memory_space<vmem>>, vector<32x96xf32>
    %c0_7 = arith.constant 0 : index
    %c0_8 = arith.constant 0 : index
    %8 = vector.load %arg0[%c0_7, %c0_8] : memref<8x16xf32, #tpu.memory_space<vmem>>, vector<8x16xf32>
    %c0_9 = arith.constant 0 : index
    %c0_10 = arith.constant 0 : index
    %9 = vector.load %arg1[%c0_9, %c0_10] : memref<184x256xf32, #tpu.memory_space<vmem>>, vector<16x32xf32>
    %cst = arith.constant dense<0.000000e+00> : vector<8x32xf32>
    %10 = tpu.matmul %8, %9, %cst {dimension_numbers = #tpu.dot_dimension_numbers<[1], [0], [0], [1], [0, 0, 1, 1], [], []>} : vector<8x16xf32>, vector<16x32xf32>, vector<8x32xf32> -> vector<8x32xf32>
    %11 = vector.broadcast %0 : vector<1x32xf32> to vector<8x32xf32>
    %12 = arith.addf %10, %11 : vector<8x32xf32>
    %cst_11 = arith.constant 0.000000e+00 : f32
    %13 = vector.broadcast %cst_11 : f32 to vector<8x32xf32>
    %14 = arith.cmpf ogt, %12, %13 : vector<8x32xf32>
    %cst_12 = arith.constant 0.00999999977 : f32
    %15 = vector.broadcast %cst_12 : f32 to vector<8x32xf32>
    %16 = arith.mulf %15, %12 : vector<8x32xf32>
    %17 = arith.select %14, %12, %16 : vector<8x32xi1>, vector<8x32xf32>
    %c24 = arith.constant 24 : index
    %c0_13 = arith.constant 0 : index
    %18 = vector.load %arg1[%c24, %c0_13] : memref<184x256xf32, #tpu.memory_space<vmem>>, vector<32x32xf32>
    %cst_14 = arith.constant dense<0.000000e+00> : vector<8x32xf32>
    %19 = tpu.matmul %17, %18, %cst_14 {dimension_numbers = #tpu.dot_dimension_numbers<[1], [0], [0], [1], [0, 0, 1, 1], [], []>} : vector<8x32xf32>, vector<32x32xf32>, vector<8x32xf32> -> vector<8x32xf32>
    %20 = vector.broadcast %1 : vector<1x32xf32> to vector<8x32xf32>
    %21 = arith.addf %19, %20 : vector<8x32xf32>
    %cst_15 = arith.constant 0.000000e+00 : f32
    %22 = vector.broadcast %cst_15 : f32 to vector<8x32xf32>
    %23 = arith.cmpf ogt, %21, %22 : vector<8x32xf32>
    %cst_16 = arith.constant 0.00999999977 : f32
    %24 = vector.broadcast %cst_16 : f32 to vector<8x32xf32>
    %25 = arith.mulf %24, %21 : vector<8x32xf32>
    %26 = arith.select %23, %21, %25 : vector<8x32xi1>, vector<8x32xf32>
    %c56 = arith.constant 56 : index
    %c0_17 = arith.constant 0 : index
    %27 = vector.load %arg1[%c56, %c0_17] : memref<184x256xf32, #tpu.memory_space<vmem>>, vector<32x96xf32>
    %cst_18 = arith.constant dense<0.000000e+00> : vector<8x96xf32>
    %28 = tpu.matmul %26, %27, %cst_18 {dimension_numbers = #tpu.dot_dimension_numbers<[1], [0], [0], [1], [0, 0, 1, 1], [], []>} : vector<8x32xf32>, vector<32x96xf32>, vector<8x96xf32> -> vector<8x96xf32>
    %29 = vector.broadcast %2 : vector<1x96xf32> to vector<8x96xf32>
    %30 = arith.addf %28, %29 : vector<8x96xf32>
    %c0_19 = arith.constant 0 : index
    %c0_20 = arith.constant 0 : index
    %31 = vector.load %arg2[%c0_19, %c0_20] : memref<2x32xf32, #tpu.memory_space<vmem>>, vector<1x32xf32>
    %c1 = arith.constant 1 : index
    %c0_21 = arith.constant 0 : index
    %32 = vector.load %arg2[%c1, %c0_21] : memref<2x32xf32, #tpu.memory_space<vmem>>, vector<1x32xf32>
    %cst_22 = arith.constant dense<0.000000e+00> : vector<1x256xf32>
    %33 = tpu.matmul %31, %6, %cst_22 {dimension_numbers = #tpu.dot_dimension_numbers<[1], [0], [0], [1], [0, 0, 1, 1], [], []>} : vector<1x32xf32>, vector<32x256xf32>, vector<1x256xf32> -> vector<1x256xf32>
    %34 = arith.addf %33, %3 : vector<1x256xf32>
    %35 = vector.extract_strided_slice %34 {offsets = [0, 128], sizes = [1, 96], strides = [1, 1]} : vector<1x256xf32> to vector<1x96xf32>
    %cst_23 = arith.constant dense<0.000000e+00> : vector<1x96xf32>
    %36 = tpu.matmul %32, %7, %cst_23 {dimension_numbers = #tpu.dot_dimension_numbers<[1], [0], [0], [1], [0, 0, 1, 1], [], []>} : vector<1x32xf32>, vector<32x96xf32>, vector<1x96xf32> -> vector<1x96xf32>
    %37 = arith.addf %36, %4 : vector<1x96xf32>
    %38 = vector.extract_strided_slice %30 {offsets = [0, 0], sizes = [1, 96], strides = [1, 1]} : vector<8x96xf32> to vector<1x96xf32>
    %39 = vector.extract_strided_slice %38 {offsets = [0, 0], sizes = [1, 64], strides = [1, 1]} : vector<1x96xf32> to vector<1x64xf32>
    %40 = vector.extract_strided_slice %35 {offsets = [0, 0], sizes = [1, 64], strides = [1, 1]} : vector<1x96xf32> to vector<1x64xf32>
    %41 = arith.addf %39, %40 : vector<1x64xf32>
    %42 = arith.negf %41 : vector<1x64xf32>
    %43 = math.exp %42 : vector<1x64xf32>
    %cst_24 = arith.constant 1.000000e+00 : f32
    %44 = vector.broadcast %cst_24 : f32 to vector<1x64xf32>
    %45 = arith.addf %44, %43 : vector<1x64xf32>
    %46 = arith.divf %44, %45 : vector<1x64xf32>
    %47 = vector.extract_strided_slice %46 {offsets = [0, 0], sizes = [1, 32], strides = [1, 1]} : vector<1x64xf32> to vector<1x32xf32>
    %48 = vector.extract_strided_slice %46 {offsets = [0, 32], sizes = [1, 32], strides = [1, 1]} : vector<1x64xf32> to vector<1x32xf32>
    %49 = vector.extract_strided_slice %38 {offsets = [0, 64], sizes = [1, 32], strides = [1, 1]} : vector<1x96xf32> to vector<1x32xf32>
    %50 = vector.extract_strided_slice %35 {offsets = [0, 64], sizes = [1, 32], strides = [1, 1]} : vector<1x96xf32> to vector<1x32xf32>
    %51 = arith.mulf %47, %50 : vector<1x32xf32>
    %52 = arith.addf %49, %51 : vector<1x32xf32>
    %53 = math.tanh %52 : vector<1x32xf32>
    %cst_25 = arith.constant 1.000000e+00 : f32
    %54 = vector.broadcast %cst_25 : f32 to vector<1x32xf32>
    %55 = arith.subf %54, %48 : vector<1x32xf32>
    %56 = arith.mulf %55, %53 : vector<1x32xf32>
    %57 = arith.mulf %48, %31 : vector<1x32xf32>
    %58 = arith.addf %56, %57 : vector<1x32xf32>
    %cst_26 = arith.constant dense<0.000000e+00> : vector<1x256xf32>
    %59 = tpu.matmul %58, %6, %cst_26 {dimension_numbers = #tpu.dot_dimension_numbers<[1], [0], [0], [1], [0, 0, 1, 1], [], []>} : vector<1x32xf32>, vector<32x256xf32>, vector<1x256xf32> -> vector<1x256xf32>
    %60 = arith.addf %59, %3 : vector<1x256xf32>
    %61 = vector.extract_strided_slice %60 {offsets = [0, 0], sizes = [1, 96], strides = [1, 1]} : vector<1x256xf32> to vector<1x96xf32>
    %62 = vector.extract_strided_slice %60 {offsets = [0, 128], sizes = [1, 96], strides = [1, 1]} : vector<1x256xf32> to vector<1x96xf32>
    %63 = vector.extract_strided_slice %61 {offsets = [0, 0], sizes = [1, 64], strides = [1, 1]} : vector<1x96xf32> to vector<1x64xf32>
    %64 = vector.extract_strided_slice %37 {offsets = [0, 0], sizes = [1, 64], strides = [1, 1]} : vector<1x96xf32> to vector<1x64xf32>
    %65 = arith.addf %63, %64 : vector<1x64xf32>
    %66 = arith.negf %65 : vector<1x64xf32>
    %67 = math.exp %66 : vector<1x64xf32>
    %cst_27 = arith.constant 1.000000e+00 : f32
    %68 = vector.broadcast %cst_27 : f32 to vector<1x64xf32>
    %69 = arith.addf %68, %67 : vector<1x64xf32>
    %70 = arith.divf %68, %69 : vector<1x64xf32>
    %71 = vector.extract_strided_slice %70 {offsets = [0, 0], sizes = [1, 32], strides = [1, 1]} : vector<1x64xf32> to vector<1x32xf32>
    %72 = vector.extract_strided_slice %70 {offsets = [0, 32], sizes = [1, 32], strides = [1, 1]} : vector<1x64xf32> to vector<1x32xf32>
    %73 = vector.extract_strided_slice %61 {offsets = [0, 64], sizes = [1, 32], strides = [1, 1]} : vector<1x96xf32> to vector<1x32xf32>
    %74 = vector.extract_strided_slice %37 {offsets = [0, 64], sizes = [1, 32], strides = [1, 1]} : vector<1x96xf32> to vector<1x32xf32>
    %75 = arith.mulf %71, %74 : vector<1x32xf32>
    %76 = arith.addf %73, %75 : vector<1x32xf32>
    %77 = math.tanh %76 : vector<1x32xf32>
    %cst_28 = arith.constant 1.000000e+00 : f32
    %78 = vector.broadcast %cst_28 : f32 to vector<1x32xf32>
    %79 = arith.subf %78, %72 : vector<1x32xf32>
    %80 = arith.mulf %79, %77 : vector<1x32xf32>
    %81 = arith.mulf %72, %32 : vector<1x32xf32>
    %82 = arith.addf %80, %81 : vector<1x32xf32>
    %c0_29 = arith.constant 0 : index
    %c0_30 = arith.constant 0 : index
    %83 = vector.load %arg5[%c0_29, %c0_30] : memref<8x32xf32, #tpu.memory_space<vmem>>, vector<1x32xf32>
    tpu.vector_store %arg5[%c0_29, %c0_30], %82 {strides = array<i32>} : memref<8x32xf32, #tpu.memory_space<vmem>>, vector<1x32xf32>,
    %cst_31 = arith.constant dense<0.000000e+00> : vector<1x96xf32>
    %84 = tpu.matmul %82, %7, %cst_31 {dimension_numbers = #tpu.dot_dimension_numbers<[1], [0], [0], [1], [0, 0, 1, 1], [], []>} : vector<1x32xf32>, vector<32x96xf32>, vector<1x96xf32> -> vector<1x96xf32>
    %85 = arith.addf %84, %4 : vector<1x96xf32>
    %86 = vector.extract_strided_slice %30 {offsets = [1, 0], sizes = [1, 96], strides = [1, 1]} : vector<8x96xf32> to vector<1x96xf32>
    %87 = vector.extract_strided_slice %86 {offsets = [0, 0], sizes = [1, 64], strides = [1, 1]} : vector<1x96xf32> to vector<1x64xf32>
    %88 = vector.extract_strided_slice %62 {offsets = [0, 0], sizes = [1, 64], strides = [1, 1]} : vector<1x96xf32> to vector<1x64xf32>
    %89 = arith.addf %87, %88 : vector<1x64xf32>
    %90 = arith.negf %89 : vector<1x64xf32>
    %91 = math.exp %90 : vector<1x64xf32>
    %cst_32 = arith.constant 1.000000e+00 : f32
    %92 = vector.broadcast %cst_32 : f32 to vector<1x64xf32>
    %93 = arith.addf %92, %91 : vector<1x64xf32>
    %94 = arith.divf %92, %93 : vector<1x64xf32>
    %95 = vector.extract_strided_slice %94 {offsets = [0, 0], sizes = [1, 32], strides = [1, 1]} : vector<1x64xf32> to vector<1x32xf32>
    %96 = vector.extract_strided_slice %94 {offsets = [0, 32], sizes = [1, 32], strides = [1, 1]} : vector<1x64xf32> to vector<1x32xf32>
    %97 = vector.extract_strided_slice %86 {offsets = [0, 64], sizes = [1, 32], strides = [1, 1]} : vector<1x96xf32> to vector<1x32xf32>
    %98 = vector.extract_strided_slice %62 {offsets = [0, 64], sizes = [1, 32], strides = [1, 1]} : vector<1x96xf32> to vector<1x32xf32>
    %99 = arith.mulf %95, %98 : vector<1x32xf32>
    %100 = arith.addf %97, %99 : vector<1x32xf32>
    %101 = math.tanh %100 : vector<1x32xf32>
    %cst_33 = arith.constant 1.000000e+00 : f32
    %102 = vector.broadcast %cst_33 : f32 to vector<1x32xf32>
    %103 = arith.subf %102, %96 : vector<1x32xf32>
    %104 = arith.mulf %103, %101 : vector<1x32xf32>
    %105 = arith.mulf %96, %58 : vector<1x32xf32>
    %106 = arith.addf %104, %105 : vector<1x32xf32>
    %cst_34 = arith.constant dense<0.000000e+00> : vector<1x256xf32>
    %107 = tpu.matmul %106, %6, %cst_34 {dimension_numbers = #tpu.dot_dimension_numbers<[1], [0], [0], [1], [0, 0, 1, 1], [], []>} : vector<1x32xf32>, vector<32x256xf32>, vector<1x256xf32> -> vector<1x256xf32>
    %108 = arith.addf %107, %3 : vector<1x256xf32>
    %109 = vector.extract_strided_slice %108 {offsets = [0, 0], sizes = [1, 96], strides = [1, 1]} : vector<1x256xf32> to vector<1x96xf32>
    %110 = vector.extract_strided_slice %108 {offsets = [0, 128], sizes = [1, 96], strides = [1, 1]} : vector<1x256xf32> to vector<1x96xf32>
    %111 = vector.extract_strided_slice %109 {offsets = [0, 0], sizes = [1, 64], strides = [1, 1]} : vector<1x96xf32> to vector<1x64xf32>
    %112 = vector.extract_strided_slice %85 {offsets = [0, 0], sizes = [1, 64], strides = [1, 1]} : vector<1x96xf32> to vector<1x64xf32>
    %113 = arith.addf %111, %112 : vector<1x64xf32>
    %114 = arith.negf %113 : vector<1x64xf32>
    %115 = math.exp %114 : vector<1x64xf32>
    %cst_35 = arith.constant 1.000000e+00 : f32
    %116 = vector.broadcast %cst_35 : f32 to vector<1x64xf32>
    %117 = arith.addf %116, %115 : vector<1x64xf32>
    %118 = arith.divf %116, %117 : vector<1x64xf32>
    %119 = vector.extract_strided_slice %118 {offsets = [0, 0], sizes = [1, 32], strides = [1, 1]} : vector<1x64xf32> to vector<1x32xf32>
    %120 = vector.extract_strided_slice %118 {offsets = [0, 32], sizes = [1, 32], strides = [1, 1]} : vector<1x64xf32> to vector<1x32xf32>
    %121 = vector.extract_strided_slice %109 {offsets = [0, 64], sizes = [1, 32], strides = [1, 1]} : vector<1x96xf32> to vector<1x32xf32>
    %122 = vector.extract_strided_slice %85 {offsets = [0, 64], sizes = [1, 32], strides = [1, 1]} : vector<1x96xf32> to vector<1x32xf32>
    %123 = arith.mulf %119, %122 : vector<1x32xf32>
    %124 = arith.addf %121, %123 : vector<1x32xf32>
    %125 = math.tanh %124 : vector<1x32xf32>
    %cst_36 = arith.constant 1.000000e+00 : f32
    %126 = vector.broadcast %cst_36 : f32 to vector<1x32xf32>
    %127 = arith.subf %126, %120 : vector<1x32xf32>
    %128 = arith.mulf %127, %125 : vector<1x32xf32>
    %129 = arith.mulf %120, %82 : vector<1x32xf32>
    %130 = arith.addf %128, %129 : vector<1x32xf32>
    %c1_37 = arith.constant 1 : index
    %c0_38 = arith.constant 0 : index
    %131 = vector.load %arg5[%c1_37, %c0_38] : memref<8x32xf32, #tpu.memory_space<vmem>>, vector<1x32xf32>
    tpu.vector_store %arg5[%c1_37, %c0_38], %130 {strides = array<i32>} : memref<8x32xf32, #tpu.memory_space<vmem>>, vector<1x32xf32>,
    %cst_39 = arith.constant dense<0.000000e+00> : vector<1x96xf32>
    %132 = tpu.matmul %130, %7, %cst_39 {dimension_numbers = #tpu.dot_dimension_numbers<[1], [0], [0], [1], [0, 0, 1, 1], [], []>} : vector<1x32xf32>, vector<32x96xf32>, vector<1x96xf32> -> vector<1x96xf32>
    %133 = arith.addf %132, %4 : vector<1x96xf32>
    %134 = vector.extract_strided_slice %30 {offsets = [2, 0], sizes = [1, 96], strides = [1, 1]} : vector<8x96xf32> to vector<1x96xf32>
    %135 = vector.extract_strided_slice %134 {offsets = [0, 0], sizes = [1, 64], strides = [1, 1]} : vector<1x96xf32> to vector<1x64xf32>
    %136 = vector.extract_strided_slice %110 {offsets = [0, 0], sizes = [1, 64], strides = [1, 1]} : vector<1x96xf32> to vector<1x64xf32>
    %137 = arith.addf %135, %136 : vector<1x64xf32>
    %138 = arith.negf %137 : vector<1x64xf32>
    %139 = math.exp %138 : vector<1x64xf32>
    %cst_40 = arith.constant 1.000000e+00 : f32
    %140 = vector.broadcast %cst_40 : f32 to vector<1x64xf32>
    %141 = arith.addf %140, %139 : vector<1x64xf32>
    %142 = arith.divf %140, %141 : vector<1x64xf32>
    %143 = vector.extract_strided_slice %142 {offsets = [0, 0], sizes = [1, 32], strides = [1, 1]} : vector<1x64xf32> to vector<1x32xf32>
    %144 = vector.extract_strided_slice %142 {offsets = [0, 32], sizes = [1, 32], strides = [1, 1]} : vector<1x64xf32> to vector<1x32xf32>
    %145 = vector.extract_strided_slice %134 {offsets = [0, 64], sizes = [1, 32], strides = [1, 1]} : vector<1x96xf32> to vector<1x32xf32>
    %146 = vector.extract_strided_slice %110 {offsets = [0, 64], sizes = [1, 32], strides = [1, 1]} : vector<1x96xf32> to vector<1x32xf32>
    %147 = arith.mulf %143, %146 : vector<1x32xf32>
    %148 = arith.addf %145, %147 : vector<1x32xf32>
    %149 = math.tanh %148 : vector<1x32xf32>
    %cst_41 = arith.constant 1.000000e+00 : f32
    %150 = vector.broadcast %cst_41 : f32 to vector<1x32xf32>
    %151 = arith.subf %150, %144 : vector<1x32xf32>
    %152 = arith.mulf %151, %149 : vector<1x32xf32>
    %153 = arith.mulf %144, %106 : vector<1x32xf32>
    %154 = arith.addf %152, %153 : vector<1x32xf32>
    %cst_42 = arith.constant dense<0.000000e+00> : vector<1x256xf32>
    %155 = tpu.matmul %154, %6, %cst_42 {dimension_numbers = #tpu.dot_dimension_numbers<[1], [0], [0], [1], [0, 0, 1, 1], [], []>} : vector<1x32xf32>, vector<32x256xf32>, vector<1x256xf32> -> vector<1x256xf32>
    %156 = arith.addf %155, %3 : vector<1x256xf32>
    %157 = vector.extract_strided_slice %156 {offsets = [0, 0], sizes = [1, 96], strides = [1, 1]} : vector<1x256xf32> to vector<1x96xf32>
    %158 = vector.extract_strided_slice %156 {offsets = [0, 128], sizes = [1, 96], strides = [1, 1]} : vector<1x256xf32> to vector<1x96xf32>
    %159 = vector.extract_strided_slice %157 {offsets = [0, 0], sizes = [1, 64], strides = [1, 1]} : vector<1x96xf32> to vector<1x64xf32>
    %160 = vector.extract_strided_slice %133 {offsets = [0, 0], sizes = [1, 64], strides = [1, 1]} : vector<1x96xf32> to vector<1x64xf32>
    %161 = arith.addf %159, %160 : vector<1x64xf32>
    %162 = arith.negf %161 : vector<1x64xf32>
    %163 = math.exp %162 : vector<1x64xf32>
    %cst_43 = arith.constant 1.000000e+00 : f32
    %164 = vector.broadcast %cst_43 : f32 to vector<1x64xf32>
    %165 = arith.addf %164, %163 : vector<1x64xf32>
    %166 = arith.divf %164, %165 : vector<1x64xf32>
    %167 = vector.extract_strided_slice %166 {offsets = [0, 0], sizes = [1, 32], strides = [1, 1]} : vector<1x64xf32> to vector<1x32xf32>
    %168 = vector.extract_strided_slice %166 {offsets = [0, 32], sizes = [1, 32], strides = [1, 1]} : vector<1x64xf32> to vector<1x32xf32>
    %169 = vector.extract_strided_slice %157 {offsets = [0, 64], sizes = [1, 32], strides = [1, 1]} : vector<1x96xf32> to vector<1x32xf32>
    %170 = vector.extract_strided_slice %133 {offsets = [0, 64], sizes = [1, 32], strides = [1, 1]} : vector<1x96xf32> to vector<1x32xf32>
    %171 = arith.mulf %167, %170 : vector<1x32xf32>
    %172 = arith.addf %169, %171 : vector<1x32xf32>
    %173 = math.tanh %172 : vector<1x32xf32>
    %cst_44 = arith.constant 1.000000e+00 : f32
    %174 = vector.broadcast %cst_44 : f32 to vector<1x32xf32>
    %175 = arith.subf %174, %168 : vector<1x32xf32>
    %176 = arith.mulf %175, %173 : vector<1x32xf32>
    %177 = arith.mulf %168, %130 : vector<1x32xf32>
    %178 = arith.addf %176, %177 : vector<1x32xf32>
    %c2 = arith.constant 2 : index
    %c0_45 = arith.constant 0 : index
    %179 = vector.load %arg5[%c2, %c0_45] : memref<8x32xf32, #tpu.memory_space<vmem>>, vector<1x32xf32>
    tpu.vector_store %arg5[%c2, %c0_45], %178 {strides = array<i32>} : memref<8x32xf32, #tpu.memory_space<vmem>>, vector<1x32xf32>,
    %cst_46 = arith.constant dense<0.000000e+00> : vector<1x96xf32>
    %180 = tpu.matmul %178, %7, %cst_46 {dimension_numbers = #tpu.dot_dimension_numbers<[1], [0], [0], [1], [0, 0, 1, 1], [], []>} : vector<1x32xf32>, vector<32x96xf32>, vector<1x96xf32> -> vector<1x96xf32>
    %181 = arith.addf %180, %4 : vector<1x96xf32>
    %182 = vector.extract_strided_slice %30 {offsets = [3, 0], sizes = [1, 96], strides = [1, 1]} : vector<8x96xf32> to vector<1x96xf32>
    %183 = vector.extract_strided_slice %182 {offsets = [0, 0], sizes = [1, 64], strides = [1, 1]} : vector<1x96xf32> to vector<1x64xf32>
    %184 = vector.extract_strided_slice %158 {offsets = [0, 0], sizes = [1, 64], strides = [1, 1]} : vector<1x96xf32> to vector<1x64xf32>
    %185 = arith.addf %183, %184 : vector<1x64xf32>
    %186 = arith.negf %185 : vector<1x64xf32>
    %187 = math.exp %186 : vector<1x64xf32>
    %cst_47 = arith.constant 1.000000e+00 : f32
    %188 = vector.broadcast %cst_47 : f32 to vector<1x64xf32>
    %189 = arith.addf %188, %187 : vector<1x64xf32>
    %190 = arith.divf %188, %189 : vector<1x64xf32>
    %191 = vector.extract_strided_slice %190 {offsets = [0, 0], sizes = [1, 32], strides = [1, 1]} : vector<1x64xf32> to vector<1x32xf32>
    %192 = vector.extract_strided_slice %190 {offsets = [0, 32], sizes = [1, 32], strides = [1, 1]} : vector<1x64xf32> to vector<1x32xf32>
    %193 = vector.extract_strided_slice %182 {offsets = [0, 64], sizes = [1, 32], strides = [1, 1]} : vector<1x96xf32> to vector<1x32xf32>
    %194 = vector.extract_strided_slice %158 {offsets = [0, 64], sizes = [1, 32], strides = [1, 1]} : vector<1x96xf32> to vector<1x32xf32>
    %195 = arith.mulf %191, %194 : vector<1x32xf32>
    %196 = arith.addf %193, %195 : vector<1x32xf32>
    %197 = math.tanh %196 : vector<1x32xf32>
    %cst_48 = arith.constant 1.000000e+00 : f32
    %198 = vector.broadcast %cst_48 : f32 to vector<1x32xf32>
    %199 = arith.subf %198, %192 : vector<1x32xf32>
    %200 = arith.mulf %199, %197 : vector<1x32xf32>
    %201 = arith.mulf %192, %154 : vector<1x32xf32>
    %202 = arith.addf %200, %201 : vector<1x32xf32>
    %cst_49 = arith.constant dense<0.000000e+00> : vector<1x256xf32>
    %203 = tpu.matmul %202, %6, %cst_49 {dimension_numbers = #tpu.dot_dimension_numbers<[1], [0], [0], [1], [0, 0, 1, 1], [], []>} : vector<1x32xf32>, vector<32x256xf32>, vector<1x256xf32> -> vector<1x256xf32>
    %204 = arith.addf %203, %3 : vector<1x256xf32>
    %205 = vector.extract_strided_slice %204 {offsets = [0, 0], sizes = [1, 96], strides = [1, 1]} : vector<1x256xf32> to vector<1x96xf32>
    %206 = vector.extract_strided_slice %204 {offsets = [0, 128], sizes = [1, 96], strides = [1, 1]} : vector<1x256xf32> to vector<1x96xf32>
    %207 = vector.extract_strided_slice %205 {offsets = [0, 0], sizes = [1, 64], strides = [1, 1]} : vector<1x96xf32> to vector<1x64xf32>
    %208 = vector.extract_strided_slice %181 {offsets = [0, 0], sizes = [1, 64], strides = [1, 1]} : vector<1x96xf32> to vector<1x64xf32>
    %209 = arith.addf %207, %208 : vector<1x64xf32>
    %210 = arith.negf %209 : vector<1x64xf32>
    %211 = math.exp %210 : vector<1x64xf32>
    %cst_50 = arith.constant 1.000000e+00 : f32
    %212 = vector.broadcast %cst_50 : f32 to vector<1x64xf32>
    %213 = arith.addf %212, %211 : vector<1x64xf32>
    %214 = arith.divf %212, %213 : vector<1x64xf32>
    %215 = vector.extract_strided_slice %214 {offsets = [0, 0], sizes = [1, 32], strides = [1, 1]} : vector<1x64xf32> to vector<1x32xf32>
    %216 = vector.extract_strided_slice %214 {offsets = [0, 32], sizes = [1, 32], strides = [1, 1]} : vector<1x64xf32> to vector<1x32xf32>
    %217 = vector.extract_strided_slice %205 {offsets = [0, 64], sizes = [1, 32], strides = [1, 1]} : vector<1x96xf32> to vector<1x32xf32>
    %218 = vector.extract_strided_slice %181 {offsets = [0, 64], sizes = [1, 32], strides = [1, 1]} : vector<1x96xf32> to vector<1x32xf32>
    %219 = arith.mulf %215, %218 : vector<1x32xf32>
    %220 = arith.addf %217, %219 : vector<1x32xf32>
    %221 = math.tanh %220 : vector<1x32xf32>
    %cst_51 = arith.constant 1.000000e+00 : f32
    %222 = vector.broadcast %cst_51 : f32 to vector<1x32xf32>
    %223 = arith.subf %222, %216 : vector<1x32xf32>
    %224 = arith.mulf %223, %221 : vector<1x32xf32>
    %225 = arith.mulf %216, %178 : vector<1x32xf32>
    %226 = arith.addf %224, %225 : vector<1x32xf32>
    %c3 = arith.constant 3 : index
    %c0_52 = arith.constant 0 : index
    %227 = vector.load %arg5[%c3, %c0_52] : memref<8x32xf32, #tpu.memory_space<vmem>>, vector<1x32xf32>
    tpu.vector_store %arg5[%c3, %c0_52], %226 {strides = array<i32>} : memref<8x32xf32, #tpu.memory_space<vmem>>, vector<1x32xf32>,
    %cst_53 = arith.constant dense<0.000000e+00> : vector<1x96xf32>
    %228 = tpu.matmul %226, %7, %cst_53 {dimension_numbers = #tpu.dot_dimension_numbers<[1], [0], [0], [1], [0, 0, 1, 1], [], []>} : vector<1x32xf32>, vector<32x96xf32>, vector<1x96xf32> -> vector<1x96xf32>
    %229 = arith.addf %228, %4 : vector<1x96xf32>
    %230 = vector.extract_strided_slice %30 {offsets = [4, 0], sizes = [1, 96], strides = [1, 1]} : vector<8x96xf32> to vector<1x96xf32>
    %231 = vector.extract_strided_slice %230 {offsets = [0, 0], sizes = [1, 64], strides = [1, 1]} : vector<1x96xf32> to vector<1x64xf32>
    %232 = vector.extract_strided_slice %206 {offsets = [0, 0], sizes = [1, 64], strides = [1, 1]} : vector<1x96xf32> to vector<1x64xf32>
    %233 = arith.addf %231, %232 : vector<1x64xf32>
    %234 = arith.negf %233 : vector<1x64xf32>
    %235 = math.exp %234 : vector<1x64xf32>
    %cst_54 = arith.constant 1.000000e+00 : f32
    %236 = vector.broadcast %cst_54 : f32 to vector<1x64xf32>
    %237 = arith.addf %236, %235 : vector<1x64xf32>
    %238 = arith.divf %236, %237 : vector<1x64xf32>
    %239 = vector.extract_strided_slice %238 {offsets = [0, 0], sizes = [1, 32], strides = [1, 1]} : vector<1x64xf32> to vector<1x32xf32>
    %240 = vector.extract_strided_slice %238 {offsets = [0, 32], sizes = [1, 32], strides = [1, 1]} : vector<1x64xf32> to vector<1x32xf32>
    %241 = vector.extract_strided_slice %230 {offsets = [0, 64], sizes = [1, 32], strides = [1, 1]} : vector<1x96xf32> to vector<1x32xf32>
    %242 = vector.extract_strided_slice %206 {offsets = [0, 64], sizes = [1, 32], strides = [1, 1]} : vector<1x96xf32> to vector<1x32xf32>
    %243 = arith.mulf %239, %242 : vector<1x32xf32>
    %244 = arith.addf %241, %243 : vector<1x32xf32>
    %245 = math.tanh %244 : vector<1x32xf32>
    %cst_55 = arith.constant 1.000000e+00 : f32
    %246 = vector.broadcast %cst_55 : f32 to vector<1x32xf32>
    %247 = arith.subf %246, %240 : vector<1x32xf32>
    %248 = arith.mulf %247, %245 : vector<1x32xf32>
    %249 = arith.mulf %240, %202 : vector<1x32xf32>
    %250 = arith.addf %248, %249 : vector<1x32xf32>
    %cst_56 = arith.constant dense<0.000000e+00> : vector<1x256xf32>
    %251 = tpu.matmul %250, %6, %cst_56 {dimension_numbers = #tpu.dot_dimension_numbers<[1], [0], [0], [1], [0, 0, 1, 1], [], []>} : vector<1x32xf32>, vector<32x256xf32>, vector<1x256xf32> -> vector<1x256xf32>
    %252 = arith.addf %251, %3 : vector<1x256xf32>
    %253 = vector.extract_strided_slice %252 {offsets = [0, 0], sizes = [1, 96], strides = [1, 1]} : vector<1x256xf32> to vector<1x96xf32>
    %254 = vector.extract_strided_slice %252 {offsets = [0, 128], sizes = [1, 96], strides = [1, 1]} : vector<1x256xf32> to vector<1x96xf32>
    %255 = vector.extract_strided_slice %253 {offsets = [0, 0], sizes = [1, 64], strides = [1, 1]} : vector<1x96xf32> to vector<1x64xf32>
    %256 = vector.extract_strided_slice %229 {offsets = [0, 0], sizes = [1, 64], strides = [1, 1]} : vector<1x96xf32> to vector<1x64xf32>
    %257 = arith.addf %255, %256 : vector<1x64xf32>
    %258 = arith.negf %257 : vector<1x64xf32>
    %259 = math.exp %258 : vector<1x64xf32>
    %cst_57 = arith.constant 1.000000e+00 : f32
    %260 = vector.broadcast %cst_57 : f32 to vector<1x64xf32>
    %261 = arith.addf %260, %259 : vector<1x64xf32>
    %262 = arith.divf %260, %261 : vector<1x64xf32>
    %263 = vector.extract_strided_slice %262 {offsets = [0, 0], sizes = [1, 32], strides = [1, 1]} : vector<1x64xf32> to vector<1x32xf32>
    %264 = vector.extract_strided_slice %262 {offsets = [0, 32], sizes = [1, 32], strides = [1, 1]} : vector<1x64xf32> to vector<1x32xf32>
    %265 = vector.extract_strided_slice %253 {offsets = [0, 64], sizes = [1, 32], strides = [1, 1]} : vector<1x96xf32> to vector<1x32xf32>
    %266 = vector.extract_strided_slice %229 {offsets = [0, 64], sizes = [1, 32], strides = [1, 1]} : vector<1x96xf32> to vector<1x32xf32>
    %267 = arith.mulf %263, %266 : vector<1x32xf32>
    %268 = arith.addf %265, %267 : vector<1x32xf32>
    %269 = math.tanh %268 : vector<1x32xf32>
    %cst_58 = arith.constant 1.000000e+00 : f32
    %270 = vector.broadcast %cst_58 : f32 to vector<1x32xf32>
    %271 = arith.subf %270, %264 : vector<1x32xf32>
    %272 = arith.mulf %271, %269 : vector<1x32xf32>
    %273 = arith.mulf %264, %226 : vector<1x32xf32>
    %274 = arith.addf %272, %273 : vector<1x32xf32>
    %c4 = arith.constant 4 : index
    %c0_59 = arith.constant 0 : index
    %275 = vector.load %arg5[%c4, %c0_59] : memref<8x32xf32, #tpu.memory_space<vmem>>, vector<1x32xf32>
    tpu.vector_store %arg5[%c4, %c0_59], %274 {strides = array<i32>} : memref<8x32xf32, #tpu.memory_space<vmem>>, vector<1x32xf32>,
    %cst_60 = arith.constant dense<0.000000e+00> : vector<1x96xf32>
    %276 = tpu.matmul %274, %7, %cst_60 {dimension_numbers = #tpu.dot_dimension_numbers<[1], [0], [0], [1], [0, 0, 1, 1], [], []>} : vector<1x32xf32>, vector<32x96xf32>, vector<1x96xf32> -> vector<1x96xf32>
    %277 = arith.addf %276, %4 : vector<1x96xf32>
    %278 = vector.extract_strided_slice %30 {offsets = [5, 0], sizes = [1, 96], strides = [1, 1]} : vector<8x96xf32> to vector<1x96xf32>
    %279 = vector.extract_strided_slice %278 {offsets = [0, 0], sizes = [1, 64], strides = [1, 1]} : vector<1x96xf32> to vector<1x64xf32>
    %280 = vector.extract_strided_slice %254 {offsets = [0, 0], sizes = [1, 64], strides = [1, 1]} : vector<1x96xf32> to vector<1x64xf32>
    %281 = arith.addf %279, %280 : vector<1x64xf32>
    %282 = arith.negf %281 : vector<1x64xf32>
    %283 = math.exp %282 : vector<1x64xf32>
    %cst_61 = arith.constant 1.000000e+00 : f32
    %284 = vector.broadcast %cst_61 : f32 to vector<1x64xf32>
    %285 = arith.addf %284, %283 : vector<1x64xf32>
    %286 = arith.divf %284, %285 : vector<1x64xf32>
    %287 = vector.extract_strided_slice %286 {offsets = [0, 0], sizes = [1, 32], strides = [1, 1]} : vector<1x64xf32> to vector<1x32xf32>
    %288 = vector.extract_strided_slice %286 {offsets = [0, 32], sizes = [1, 32], strides = [1, 1]} : vector<1x64xf32> to vector<1x32xf32>
    %289 = vector.extract_strided_slice %278 {offsets = [0, 64], sizes = [1, 32], strides = [1, 1]} : vector<1x96xf32> to vector<1x32xf32>
    %290 = vector.extract_strided_slice %254 {offsets = [0, 64], sizes = [1, 32], strides = [1, 1]} : vector<1x96xf32> to vector<1x32xf32>
    %291 = arith.mulf %287, %290 : vector<1x32xf32>
    %292 = arith.addf %289, %291 : vector<1x32xf32>
    %293 = math.tanh %292 : vector<1x32xf32>
    %cst_62 = arith.constant 1.000000e+00 : f32
    %294 = vector.broadcast %cst_62 : f32 to vector<1x32xf32>
    %295 = arith.subf %294, %288 : vector<1x32xf32>
    %296 = arith.mulf %295, %293 : vector<1x32xf32>
    %297 = arith.mulf %288, %250 : vector<1x32xf32>
    %298 = arith.addf %296, %297 : vector<1x32xf32>
    %cst_63 = arith.constant dense<0.000000e+00> : vector<1x256xf32>
    %299 = tpu.matmul %298, %6, %cst_63 {dimension_numbers = #tpu.dot_dimension_numbers<[1], [0], [0], [1], [0, 0, 1, 1], [], []>} : vector<1x32xf32>, vector<32x256xf32>, vector<1x256xf32> -> vector<1x256xf32>
    %300 = arith.addf %299, %3 : vector<1x256xf32>
    %301 = vector.extract_strided_slice %300 {offsets = [0, 0], sizes = [1, 96], strides = [1, 1]} : vector<1x256xf32> to vector<1x96xf32>
    %302 = vector.extract_strided_slice %300 {offsets = [0, 128], sizes = [1, 96], strides = [1, 1]} : vector<1x256xf32> to vector<1x96xf32>
    %303 = vector.extract_strided_slice %301 {offsets = [0, 0], sizes = [1, 64], strides = [1, 1]} : vector<1x96xf32> to vector<1x64xf32>
    %304 = vector.extract_strided_slice %277 {offsets = [0, 0], sizes = [1, 64], strides = [1, 1]} : vector<1x96xf32> to vector<1x64xf32>
    %305 = arith.addf %303, %304 : vector<1x64xf32>
    %306 = arith.negf %305 : vector<1x64xf32>
    %307 = math.exp %306 : vector<1x64xf32>
    %cst_64 = arith.constant 1.000000e+00 : f32
    %308 = vector.broadcast %cst_64 : f32 to vector<1x64xf32>
    %309 = arith.addf %308, %307 : vector<1x64xf32>
    %310 = arith.divf %308, %309 : vector<1x64xf32>
    %311 = vector.extract_strided_slice %310 {offsets = [0, 0], sizes = [1, 32], strides = [1, 1]} : vector<1x64xf32> to vector<1x32xf32>
    %312 = vector.extract_strided_slice %310 {offsets = [0, 32], sizes = [1, 32], strides = [1, 1]} : vector<1x64xf32> to vector<1x32xf32>
    %313 = vector.extract_strided_slice %301 {offsets = [0, 64], sizes = [1, 32], strides = [1, 1]} : vector<1x96xf32> to vector<1x32xf32>
    %314 = vector.extract_strided_slice %277 {offsets = [0, 64], sizes = [1, 32], strides = [1, 1]} : vector<1x96xf32> to vector<1x32xf32>
    %315 = arith.mulf %311, %314 : vector<1x32xf32>
    %316 = arith.addf %313, %315 : vector<1x32xf32>
    %317 = math.tanh %316 : vector<1x32xf32>
    %cst_65 = arith.constant 1.000000e+00 : f32
    %318 = vector.broadcast %cst_65 : f32 to vector<1x32xf32>
    %319 = arith.subf %318, %312 : vector<1x32xf32>
    %320 = arith.mulf %319, %317 : vector<1x32xf32>
    %321 = arith.mulf %312, %274 : vector<1x32xf32>
    %322 = arith.addf %320, %321 : vector<1x32xf32>
    %c5 = arith.constant 5 : index
    %c0_66 = arith.constant 0 : index
    %323 = vector.load %arg5[%c5, %c0_66] : memref<8x32xf32, #tpu.memory_space<vmem>>, vector<1x32xf32>
    tpu.vector_store %arg5[%c5, %c0_66], %322 {strides = array<i32>} : memref<8x32xf32, #tpu.memory_space<vmem>>, vector<1x32xf32>,
    %cst_67 = arith.constant dense<0.000000e+00> : vector<1x96xf32>
    %324 = tpu.matmul %322, %7, %cst_67 {dimension_numbers = #tpu.dot_dimension_numbers<[1], [0], [0], [1], [0, 0, 1, 1], [], []>} : vector<1x32xf32>, vector<32x96xf32>, vector<1x96xf32> -> vector<1x96xf32>
    %325 = arith.addf %324, %4 : vector<1x96xf32>
    %326 = vector.extract_strided_slice %30 {offsets = [6, 0], sizes = [1, 96], strides = [1, 1]} : vector<8x96xf32> to vector<1x96xf32>
    %327 = vector.extract_strided_slice %326 {offsets = [0, 0], sizes = [1, 64], strides = [1, 1]} : vector<1x96xf32> to vector<1x64xf32>
    %328 = vector.extract_strided_slice %302 {offsets = [0, 0], sizes = [1, 64], strides = [1, 1]} : vector<1x96xf32> to vector<1x64xf32>
    %329 = arith.addf %327, %328 : vector<1x64xf32>
    %330 = arith.negf %329 : vector<1x64xf32>
    %331 = math.exp %330 : vector<1x64xf32>
    %cst_68 = arith.constant 1.000000e+00 : f32
    %332 = vector.broadcast %cst_68 : f32 to vector<1x64xf32>
    %333 = arith.addf %332, %331 : vector<1x64xf32>
    %334 = arith.divf %332, %333 : vector<1x64xf32>
    %335 = vector.extract_strided_slice %334 {offsets = [0, 0], sizes = [1, 32], strides = [1, 1]} : vector<1x64xf32> to vector<1x32xf32>
    %336 = vector.extract_strided_slice %334 {offsets = [0, 32], sizes = [1, 32], strides = [1, 1]} : vector<1x64xf32> to vector<1x32xf32>
    %337 = vector.extract_strided_slice %326 {offsets = [0, 64], sizes = [1, 32], strides = [1, 1]} : vector<1x96xf32> to vector<1x32xf32>
    %338 = vector.extract_strided_slice %302 {offsets = [0, 64], sizes = [1, 32], strides = [1, 1]} : vector<1x96xf32> to vector<1x32xf32>
    %339 = arith.mulf %335, %338 : vector<1x32xf32>
    %340 = arith.addf %337, %339 : vector<1x32xf32>
    %341 = math.tanh %340 : vector<1x32xf32>
    %cst_69 = arith.constant 1.000000e+00 : f32
    %342 = vector.broadcast %cst_69 : f32 to vector<1x32xf32>
    %343 = arith.subf %342, %336 : vector<1x32xf32>
    %344 = arith.mulf %343, %341 : vector<1x32xf32>
    %345 = arith.mulf %336, %298 : vector<1x32xf32>
    %346 = arith.addf %344, %345 : vector<1x32xf32>
    %cst_70 = arith.constant dense<0.000000e+00> : vector<1x256xf32>
    %347 = tpu.matmul %346, %6, %cst_70 {dimension_numbers = #tpu.dot_dimension_numbers<[1], [0], [0], [1], [0, 0, 1, 1], [], []>} : vector<1x32xf32>, vector<32x256xf32>, vector<1x256xf32> -> vector<1x256xf32>
    %348 = arith.addf %347, %3 : vector<1x256xf32>
    %349 = vector.extract_strided_slice %348 {offsets = [0, 0], sizes = [1, 96], strides = [1, 1]} : vector<1x256xf32> to vector<1x96xf32>
    %350 = vector.extract_strided_slice %348 {offsets = [0, 128], sizes = [1, 96], strides = [1, 1]} : vector<1x256xf32> to vector<1x96xf32>
    %351 = vector.extract_strided_slice %349 {offsets = [0, 0], sizes = [1, 64], strides = [1, 1]} : vector<1x96xf32> to vector<1x64xf32>
    %352 = vector.extract_strided_slice %325 {offsets = [0, 0], sizes = [1, 64], strides = [1, 1]} : vector<1x96xf32> to vector<1x64xf32>
    %353 = arith.addf %351, %352 : vector<1x64xf32>
    %354 = arith.negf %353 : vector<1x64xf32>
    %355 = math.exp %354 : vector<1x64xf32>
    %cst_71 = arith.constant 1.000000e+00 : f32
    %356 = vector.broadcast %cst_71 : f32 to vector<1x64xf32>
    %357 = arith.addf %356, %355 : vector<1x64xf32>
    %358 = arith.divf %356, %357 : vector<1x64xf32>
    %359 = vector.extract_strided_slice %358 {offsets = [0, 0], sizes = [1, 32], strides = [1, 1]} : vector<1x64xf32> to vector<1x32xf32>
    %360 = vector.extract_strided_slice %358 {offsets = [0, 32], sizes = [1, 32], strides = [1, 1]} : vector<1x64xf32> to vector<1x32xf32>
    %361 = vector.extract_strided_slice %349 {offsets = [0, 64], sizes = [1, 32], strides = [1, 1]} : vector<1x96xf32> to vector<1x32xf32>
    %362 = vector.extract_strided_slice %325 {offsets = [0, 64], sizes = [1, 32], strides = [1, 1]} : vector<1x96xf32> to vector<1x32xf32>
    %363 = arith.mulf %359, %362 : vector<1x32xf32>
    %364 = arith.addf %361, %363 : vector<1x32xf32>
    %365 = math.tanh %364 : vector<1x32xf32>
    %cst_72 = arith.constant 1.000000e+00 : f32
    %366 = vector.broadcast %cst_72 : f32 to vector<1x32xf32>
    %367 = arith.subf %366, %360 : vector<1x32xf32>
    %368 = arith.mulf %367, %365 : vector<1x32xf32>
    %369 = arith.mulf %360, %322 : vector<1x32xf32>
    %370 = arith.addf %368, %369 : vector<1x32xf32>
    %c6 = arith.constant 6 : index
    %c0_73 = arith.constant 0 : index
    %371 = vector.load %arg5[%c6, %c0_73] : memref<8x32xf32, #tpu.memory_space<vmem>>, vector<1x32xf32>
    tpu.vector_store %arg5[%c6, %c0_73], %370 {strides = array<i32>} : memref<8x32xf32, #tpu.memory_space<vmem>>, vector<1x32xf32>,
    %cst_74 = arith.constant dense<0.000000e+00> : vector<1x96xf32>
    %372 = tpu.matmul %370, %7, %cst_74 {dimension_numbers = #tpu.dot_dimension_numbers<[1], [0], [0], [1], [0, 0, 1, 1], [], []>} : vector<1x32xf32>, vector<32x96xf32>, vector<1x96xf32> -> vector<1x96xf32>
    %373 = arith.addf %372, %4 : vector<1x96xf32>
    %374 = vector.extract_strided_slice %30 {offsets = [7, 0], sizes = [1, 96], strides = [1, 1]} : vector<8x96xf32> to vector<1x96xf32>
    %375 = vector.extract_strided_slice %374 {offsets = [0, 0], sizes = [1, 64], strides = [1, 1]} : vector<1x96xf32> to vector<1x64xf32>
    %376 = vector.extract_strided_slice %350 {offsets = [0, 0], sizes = [1, 64], strides = [1, 1]} : vector<1x96xf32> to vector<1x64xf32>
    %377 = arith.addf %375, %376 : vector<1x64xf32>
    %378 = arith.negf %377 : vector<1x64xf32>
    %379 = math.exp %378 : vector<1x64xf32>
    %cst_75 = arith.constant 1.000000e+00 : f32
    %380 = vector.broadcast %cst_75 : f32 to vector<1x64xf32>
    %381 = arith.addf %380, %379 : vector<1x64xf32>
    %382 = arith.divf %380, %381 : vector<1x64xf32>
    %383 = vector.extract_strided_slice %382 {offsets = [0, 0], sizes = [1, 32], strides = [1, 1]} : vector<1x64xf32> to vector<1x32xf32>
    %384 = vector.extract_strided_slice %382 {offsets = [0, 32], sizes = [1, 32], strides = [1, 1]} : vector<1x64xf32> to vector<1x32xf32>
    %385 = vector.extract_strided_slice %374 {offsets = [0, 64], sizes = [1, 32], strides = [1, 1]} : vector<1x96xf32> to vector<1x32xf32>
    %386 = vector.extract_strided_slice %350 {offsets = [0, 64], sizes = [1, 32], strides = [1, 1]} : vector<1x96xf32> to vector<1x32xf32>
    %387 = arith.mulf %383, %386 : vector<1x32xf32>
    %388 = arith.addf %385, %387 : vector<1x32xf32>
    %389 = math.tanh %388 : vector<1x32xf32>
    %cst_76 = arith.constant 1.000000e+00 : f32
    %390 = vector.broadcast %cst_76 : f32 to vector<1x32xf32>
    %391 = arith.subf %390, %384 : vector<1x32xf32>
    %392 = arith.mulf %391, %389 : vector<1x32xf32>
    %393 = arith.mulf %384, %346 : vector<1x32xf32>
    %394 = arith.addf %392, %393 : vector<1x32xf32>
    %cst_77 = arith.constant dense<0.000000e+00> : vector<1x256xf32>
    %395 = tpu.matmul %394, %6, %cst_77 {dimension_numbers = #tpu.dot_dimension_numbers<[1], [0], [0], [1], [0, 0, 1, 1], [], []>} : vector<1x32xf32>, vector<32x256xf32>, vector<1x256xf32> -> vector<1x256xf32>
    %396 = arith.addf %395, %3 : vector<1x256xf32>
    %397 = vector.extract_strided_slice %396 {offsets = [0, 0], sizes = [1, 96], strides = [1, 1]} : vector<1x256xf32> to vector<1x96xf32>
    %398 = vector.extract_strided_slice %397 {offsets = [0, 0], sizes = [1, 64], strides = [1, 1]} : vector<1x96xf32> to vector<1x64xf32>
    %399 = vector.extract_strided_slice %373 {offsets = [0, 0], sizes = [1, 64], strides = [1, 1]} : vector<1x96xf32> to vector<1x64xf32>
    %400 = arith.addf %398, %399 : vector<1x64xf32>
    %401 = arith.negf %400 : vector<1x64xf32>
    %402 = math.exp %401 : vector<1x64xf32>
    %cst_78 = arith.constant 1.000000e+00 : f32
    %403 = vector.broadcast %cst_78 : f32 to vector<1x64xf32>
    %404 = arith.addf %403, %402 : vector<1x64xf32>
    %405 = arith.divf %403, %404 : vector<1x64xf32>
    %406 = vector.extract_strided_slice %405 {offsets = [0, 0], sizes = [1, 32], strides = [1, 1]} : vector<1x64xf32> to vector<1x32xf32>
    %407 = vector.extract_strided_slice %405 {offsets = [0, 32], sizes = [1, 32], strides = [1, 1]} : vector<1x64xf32> to vector<1x32xf32>
    %408 = vector.extract_strided_slice %397 {offsets = [0, 64], sizes = [1, 32], strides = [1, 1]} : vector<1x96xf32> to vector<1x32xf32>
    %409 = vector.extract_strided_slice %373 {offsets = [0, 64], sizes = [1, 32], strides = [1, 1]} : vector<1x96xf32> to vector<1x32xf32>
    %410 = arith.mulf %406, %409 : vector<1x32xf32>
    %411 = arith.addf %408, %410 : vector<1x32xf32>
    %412 = math.tanh %411 : vector<1x32xf32>
    %cst_79 = arith.constant 1.000000e+00 : f32
    %413 = vector.broadcast %cst_79 : f32 to vector<1x32xf32>
    %414 = arith.subf %413, %407 : vector<1x32xf32>
    %415 = arith.mulf %414, %412 : vector<1x32xf32>
    %416 = arith.mulf %407, %370 : vector<1x32xf32>
    %417 = arith.addf %415, %416 : vector<1x32xf32>
    %c7 = arith.constant 7 : index
    %c0_80 = arith.constant 0 : index
    %418 = vector.load %arg5[%c7, %c0_80] : memref<8x32xf32, #tpu.memory_space<vmem>>, vector<1x32xf32>
    tpu.vector_store %arg5[%c7, %c0_80], %417 {strides = array<i32>} : memref<8x32xf32, #tpu.memory_space<vmem>>, vector<1x32xf32>,
    %c0_81 = arith.constant 0 : index
    %c0_82 = arith.constant 0 : index
    %419 = vector.load %arg5[%c0_81, %c0_82] : memref<8x32xf32, #tpu.memory_space<vmem>>, vector<8x32xf32>
    %c152 = arith.constant 152 : index
    %c0_83 = arith.constant 0 : index
    %420 = vector.load %arg1[%c152, %c0_83] : memref<184x256xf32, #tpu.memory_space<vmem>>, vector<32x128xf32>
    %cst_84 = arith.constant dense<0.000000e+00> : vector<8x128xf32>
    %421 = tpu.matmul %419, %420, %cst_84 {dimension_numbers = #tpu.dot_dimension_numbers<[1], [0], [0], [1], [0, 0, 1, 1], [], []>} : vector<8x32xf32>, vector<32x128xf32>, vector<8x128xf32> -> vector<8x128xf32>
    %422 = vector.broadcast %5 : vector<1x128xf32> to vector<8x128xf32>
    %423 = arith.addf %421, %422 : vector<8x128xf32>
    %424 = math.tanh %423 : vector<8x128xf32>
    %c0_85 = arith.constant 0 : index
    %c0_86 = arith.constant 0 : index
    %425 = vector.load %arg3[%c0_85, %c0_86] : memref<8x128xf32, #tpu.memory_space<vmem>>, vector<8x128xf32>
    tpu.vector_store %arg3[%c0_85, %c0_86], %424 {strides = array<i32>} : memref<8x128xf32, #tpu.memory_space<vmem>>, vector<8x128xf32>,
    %426 = tpu.concatenate %394, %417 in 0 : vector<1x32xf32>, vector<1x32xf32> -> vector<2x32xf32>
    %c0_87 = arith.constant 0 : index
    %c0_88 = arith.constant 0 : index
    %427 = vector.load %arg4[%c0_87, %c0_88] : memref<2x32xf32, #tpu.memory_space<vmem>>, vector<2x32xf32>
    tpu.vector_store %arg4[%c0_87, %c0_88], %426 {strides = array<i32>} : memref<2x32xf32, #tpu.memory_space<vmem>>, vector<2x32xf32>,
    return
  }
}

</mosaic_0001>

<llo_original>
// kernel: rnn_actor_forward.1
$region0: #{rnn_actor_forward.1}
  #allocation0 [shape = 'u32[]', space=smem, size = 0x4, offset = 0x4, fixed_abs, tag = 'smem constant byte address 0x4 - core index']
  #allocation1 [shape = 'u32[144,128]{1,0:T(1,128)}', space=vmem, size = 0x12000, scoped, tag = 'internal scratch']
  #allocation2 [shape = 'f32[8,32]{1,0:T(8,128)}', space=vmem, size = 0x1000, scoped, tag = 'scratch operand']
  %s0 = inlined_call_operand.hbm [shape: f32[8,16], index: 0, kind: input, shape index: {}]
  %s1 = inlined_call_operand.hbm [shape: f32[184,256], index: 1, kind: input, shape index: {}]
  %s2 = inlined_call_operand.vmem [shape: f32[2,32], index: 2, kind: input, shape index: {}]
  %s3 = inlined_call_operand.vmem [shape: f32[8,128], index: 3, kind: output, shape index: {0}]
  %s4 = inlined_call_operand.hbm [shape: f32[2,32], index: 4, kind: output, shape index: {1}]
  %5 = xla_tuple %s3, %s4
  %s6 = sld [smem:[#allocation0]]
  $region38: #{rnn_actor_forward.1} parent=0
    _
  %s8 = ssub.s32 1, %s6
  %s9 = scalar_select 0, %s8, %s6
  $region1: #{rnn_actor_forward.1} parent=0
    #allocation3 [shape = 'u8[4096]{0}', space=vmem, size = 0x1000, scoped, tag = 'input window, operand 0, single buffered']
    #allocation4 [shape = 's32[1]{0}', space=sflag, size = 0x4, scoped, tag = 'scoped memory for rnn_actor_forward.1']
    #allocation5 [shape = 's32[1]{0}', space=sflag, size = 0x4, scoped, tag = 'scoped memory for rnn_actor_forward.1']
    #allocation6 [shape = 'u8[188416]{0}', space=vmem, size = 0x2e000, scoped, tag = 'input window, operand 1, single buffered']
    #allocation7 [shape = 's32[1]{0}', space=sflag, size = 0x4, scoped, tag = 'scoped memory for rnn_actor_forward.1']
    #allocation8 [shape = 'u8[1024]{0}', space=vmem, size = 0x400, scoped, tag = 'output window, operand 1, single buffered']
    %10 = vsyncpa [#allocation4], 0
    %11 = vsyncpa [#allocation7], 0
    %12 = vsyncpa [#allocation5], 0
    // Predicated region
    $region2: #{rnn_actor_forward.1} parent=1 // pred_check
      _
    $region3: #{rnn_actor_forward.1} parent=1 // pred_check_branch
      %14 = sbr.rel (0) target = $region5
    $region4: #{rnn_actor_forward.1} parent=1 // pred_region
      %s16 = ssub.s32 128, 128
      %17 = vsyncadd [#allocation4], %s16
      %s19 = sshll.u32 [#allocation3], 4
      %s20 = int_to_ptr.vmem [resolvable:$true] %s19
      %22 = dma.hbm_to_vmem [thread:$0]  %s0, 128, %s20, [#allocation4]
    $region5: #{rnn_actor_forward.1} parent=1 // pred_fallthru
      _
    // Predicated region
    $region6: #{rnn_actor_forward.1} parent=1 // pred_check
      _
    $region7: #{rnn_actor_forward.1} parent=1 // pred_check_branch
      %24 = sbr.rel (0) target = $region9
    $region8: #{rnn_actor_forward.1} parent=1 // pred_region
      %s26 = ssub.s32 5888, 5888
      %27 = vsyncadd [#allocation7], %s26
      %s28 = sshll.u32 [#allocation6], 4
      %s29 = int_to_ptr.vmem [resolvable:$true] %s28
      %34 = dma.hbm_to_vmem [thread:$0]  %s1, 5888, %s29, [#allocation7], 256, 256, 16
    $region9: #{rnn_actor_forward.1} parent=1 // pred_fallthru
      _
    // Predicated region
    $region10: #{rnn_actor_forward.1} parent=1 // pred_check
      _
    $region11: #{rnn_actor_forward.1} parent=1 // pred_check_branch
      %36 = sbr.rel (0) target = $region13
    $region12: #{rnn_actor_forward.1} parent=1 // pred_region
      _
    $region13: #{rnn_actor_forward.1} parent=1 // pred_fallthru
      _
    // Predicated region
    $region14: #{rnn_actor_forward.1} parent=1 // pred_check
      _
    $region15: #{rnn_actor_forward.1} parent=1 // pred_check_branch
      %38 = sbr.rel (0) target = $region17
    $region16: #{rnn_actor_forward.1} parent=1 // pred_region
      %39 = dma.done [#allocation4], 128
    $region17: #{rnn_actor_forward.1} parent=1 // pred_fallthru
      _
    // Predicated region
    $region18: #{rnn_actor_forward.1} parent=1 // pred_check
      _
    $region19: #{rnn_actor_forward.1} parent=1 // pred_check_branch
      %41 = sbr.rel (0) target = $region21
    $region20: #{rnn_actor_forward.1} parent=1 // pred_region
      %42 = dma.done [#allocation7], 5888
    $region21: #{rnn_actor_forward.1} parent=1 // pred_fallthru
      _
    %v43 = vld [vmem:[#allocation6 + $0x20] ss:$0 sm:$0xff]
    %v44 = vld [vmem:[#allocation6 + $0x21] ss:$0 sm:$0xff]
    %v45 = vld [vmem:[#allocation6 + $0x22] ss:$0 sm:$0xff]
    %s46 = scalar_lea.vmem [#allocation6], 35
    %v47 = vld [vmem:[%s46] ss:$8 sm:$0x3]
    %v48 = vld [vmem:[#allocation6 + $0x24] ss:$0 sm:$0xff]
    %v49 = vld [vmem:[#allocation6 + $0x25] ss:$0 sm:$0xff]
    %v50 = vld [vmem:[#allocation6 + $0xb0] sm:$0xff]
    %v51 = vld [vmem:[#allocation6 + $0xb8] sm:$0xff]
    %v52 = vld [vmem:[#allocation6 + $0xc0] sm:$0xff]
    %v53 = vld [vmem:[#allocation6 + $0xc8] sm:$0xff]
    %v54 = vld [vmem:[#allocation6 + $0xd0] sm:$0xff]
    %v55 = vld [vmem:[#allocation6 + $0xd8] sm:$0xff]
    %v56 = vld [vmem:[#allocation6 + $0xe0] sm:$0xff]
    %v57 = vld [vmem:[#allocation6 + $0xe8] sm:$0xff]
    %v58 = vld [vmem:[#allocation6 + $0xf0] sm:$0xff]
    %v59 = vld [vmem:[#allocation6 + $0x100] sm:$0xff]
    %v60 = vld [vmem:[#allocation6 + $0x110] sm:$0xff]
    %v61 = vld [vmem:[#allocation6 + $0x120] sm:$0xff]
    %v62 = vld [vmem:[#allocation3] sm:$0xff]
    %v63 = vld [vmem:[#allocation6] sm:$0xff]
    %v64 = vld [vmem:[#allocation6 + $0x10] sm:$0xff]
    %vm65 = vcmask 130048
    %v67 = vsel %vm65, %v62, 0
    %69 = vmatprep.subr.mxu0 0.0
    %70 = vmatpush1.msra.mxu0 %v63
    %71 = vmatprep.subr.mxu0 0.0
    %72 = vmatpush1.msra.mxu0 %v64
    %73 = vmatprep.subr.mxu0 0.0
    %74 = vmatpush1.msra.mxu0 0.0
    %75 = vmatprep.subr.mxu0 0.0
    %76 = vmatpush1.msra.mxu0 0.0
    %77 = vmatprep.subr.mxu0 0.0
    %78 = vmatpush1.msra.mxu0 0.0
    %79 = vmatprep.subr.mxu0 0.0
    %80 = vmatpush1.msra.mxu0 0.0
    %81 = vmatprep.subr.mxu0 0.0
    %82 = vmatpush1.msra.mxu0 0.0
    %83 = vmatprep.subr.mxu0 0.0
    %84 = vmatpush1.msra.mxu0 0.0
    %85 = vmatprep.subr.mxu0 0.0
    %86 = vmatpush1.msra.mxu0 0.0
    %87 = vmatprep.subr.mxu0 0.0
    %88 = vmatpush1.msra.mxu0 0.0
    %89 = vmatprep.subr.mxu0 0.0
    %90 = vmatpush1.msra.mxu0 0.0
    %91 = vmatprep.subr.mxu0 0.0
    %92 = vmatpush1.msra.mxu0 0.0
    %93 = vmatprep.subr.mxu0 0.0
    %94 = vmatpush1.msra.mxu0 0.0
    %95 = vmatprep.subr.mxu0 0.0
    %96 = vmatpush1.msra.mxu0 0.0
    %97 = vmatprep.subr.mxu0 0.0
    %98 = vmatpush1.msra.mxu0 0.0
    %99 = vmatprep.subr.mxu0 0.0
    %100 = vmatpush1.msra.mxu0 0.0
    %101 = vmatprep.subr.mxu0 0.0
    %102 = vmatpush1.msra.mxu0 0.0
    %103 = vmatprep.subr.mxu0 0.0
    %104 = vmatpush1.msra.mxu0 0.0
    %105 = vmatprep.subr.mxu0 0.0
    %106 = vmatpush1.msra.mxu0 0.0
    %107 = vmatprep.subr.mxu0 0.0
    %108 = vmatpush1.msra.mxu0 0.0
    %109 = vmatprep.subr.mxu0 0.0
    %110 = vmatpush1.msra.mxu0 0.0
    %111 = vmatprep.subr.mxu0 0.0
    %112 = vmatpush1.msra.mxu0 0.0
    %113 = vmatprep.subr.mxu0 0.0
    %114 = vmatpush1.msra.mxu0 0.0
    %115 = vmatprep.subr.mxu0 0.0
    %116 = vmatpush1.msra.mxu0 0.0
    %117 = vmatprep.subr.mxu0 0.0
    %118 = vmatpush1.msra.mxu0 0.0
    %119 = vmatprep.subr.mxu0 0.0
    %120 = vmatpush1.msra.mxu0 0.0
    %121 = vmatprep.subr.mxu0 0.0
    %122 = vmatpush1.msra.mxu0 0.0
    %123 = vmatprep.subr.mxu0 0.0
    %124 = vmatpush1.msra.mxu0 0.0
    %125 = vmatprep.subr.mxu0 0.0
    %126 = vmatpush1.msra.mxu0 0.0
    %127 = vmatprep.subr.mxu0 0.0
    %128 = vmatpush1.msra.mxu0 0.0
    %129 = vmatprep.subr.mxu0 0.0
    %130 = vmatpush1.msra.mxu0 0.0
    %131 = vmatprep.subr.mxu0 0.0
    %132 = vmatpush1.msra.mxu0 0.0
    %133 = vmatprep.mubr.f32.mxu0 0.0
    %134 = vmatmul.mubr.f32.gmra.mrb[0].mxu0 %v67
    %v135 = vpop.f32.mrb[0].mxu0
    %v136 = vadd.f32 %v43, %v135
    %v137 = vpop.f32.mrb[0].mxu0
    %138 = vdwg.mxu0
    %vm139 = vcmp.gt.f32.partialorder %v136, 0.0
    %v140 = vmul.f32 %v136, 0.01
    %v141 = vsel %vm139, %v136, %v140
    %v142 = vld [vmem:[#allocation6 + $0x30] sm:$0xff]
    %v143 = vld [vmem:[#allocation6 + $0x40] sm:$0xff]
    %v144 = vld [vmem:[#allocation6 + $0x50] sm:$0xff]
    %v145 = vld [vmem:[#allocation6 + $0x60] sm:$0xff]
    %vm146 = vcmask 261120
    %v148 = vsel %vm146, %v141, 0
    %150 = vmatprep.subr.mxu0 0.0
    %151 = vmatpush1.msra.mxu0 %v142
    %152 = vmatprep.subr.mxu0 0.0
    %153 = vmatpush1.msra.mxu0 %v143
    %154 = vmatprep.subr.mxu0 0.0
    %155 = vmatpush1.msra.mxu0 %v144
    %156 = vmatprep.subr.mxu0 0.0
    %157 = vmatpush1.msra.mxu0 %v145
    %158 = vmatprep.subr.mxu0 0.0
    %159 = vmatpush1.msra.mxu0 0.0
    %160 = vmatprep.subr.mxu0 0.0
    %161 = vmatpush1.msra.mxu0 0.0
    %162 = vmatprep.subr.mxu0 0.0
    %163 = vmatpush1.msra.mxu0 0.0
    %164 = vmatprep.subr.mxu0 0.0
    %165 = vmatpush1.msra.mxu0 0.0
    %166 = vmatprep.subr.mxu0 0.0
    %167 = vmatpush1.msra.mxu0 0.0
    %168 = vmatprep.subr.mxu0 0.0
    %169 = vmatpush1.msra.mxu0 0.0
    %170 = vmatprep.subr.mxu0 0.0
    %171 = vmatpush1.msra.mxu0 0.0
    %172 = vmatprep.subr.mxu0 0.0
    %173 = vmatpush1.msra.mxu0 0.0
    %174 = vmatprep.subr.mxu0 0.0
    %175 = vmatpush1.msra.mxu0 0.0
    %176 = vmatprep.subr.mxu0 0.0
    %177 = vmatpush1.msra.mxu0 0.0
    %178 = vmatprep.subr.mxu0 0.0
    %179 = vmatpush1.msra.mxu0 0.0
    %180 = vmatprep.subr.mxu0 0.0
    %181 = vmatpush1.msra.mxu0 0.0
    %182 = vmatprep.subr.mxu0 0.0
    %183 = vmatpush1.msra.mxu0 0.0
    %184 = vmatprep.subr.mxu0 0.0
    %185 = vmatpush1.msra.mxu0 0.0
    %186 = vmatprep.subr.mxu0 0.0
    %187 = vmatpush1.msra.mxu0 0.0
    %188 = vmatprep.subr.mxu0 0.0
    %189 = vmatpush1.msra.mxu0 0.0
    %190 = vmatprep.subr.mxu0 0.0
    %191 = vmatpush1.msra.mxu0 0.0
    %192 = vmatprep.subr.mxu0 0.0
    %193 = vmatpush1.msra.mxu0 0.0
    %194 = vmatprep.subr.mxu0 0.0
    %195 = vmatpush1.msra.mxu0 0.0
    %196 = vmatprep.subr.mxu0 0.0
    %197 = vmatpush1.msra.mxu0 0.0
    %198 = vmatprep.subr.mxu0 0.0
    %199 = vmatpush1.msra.mxu0 0.0
    %200 = vmatprep.subr.mxu0 0.0
    %201 = vmatpush1.msra.mxu0 0.0
    %202 = vmatprep.subr.mxu0 0.0
    %203 = vmatpush1.msra.mxu0 0.0
    %204 = vmatprep.subr.mxu0 0.0
    %205 = vmatpush1.msra.mxu0 0.0
    %206 = vmatprep.subr.mxu0 0.0
    %207 = vmatpush1.msra.mxu0 0.0
    %208 = vmatprep.subr.mxu0 0.0
    %209 = vmatpush1.msra.mxu0 0.0
    %210 = vmatprep.subr.mxu0 0.0
    %211 = vmatpush1.msra.mxu0 0.0
    %212 = vmatprep.subr.mxu0 0.0
    %213 = vmatpush1.msra.mxu0 0.0
    %214 = vmatprep.mubr.f32.mxu0 0.0
    %215 = vmatmul.mubr.f32.gmra.mrb[0].mxu0 %v148
    %v216 = vpop.f32.mrb[0].mxu0
    %v217 = vadd.f32 %v44, %v216
    %v218 = vpop.f32.mrb[0].mxu0
    %219 = vdwg.mxu0
    %vm220 = vcmp.gt.f32.partialorder %v217, 0.0
    %v221 = vmul.f32 %v217, 0.01
    %v222 = vsel %vm220, %v217, %v221
    %v223 = vld [vmem:[#allocation6 + $0x70] sm:$0xff]
    %v224 = vld [vmem:[#allocation6 + $0x80] sm:$0xff]
    %v225 = vld [vmem:[#allocation6 + $0x90] sm:$0xff]
    %v226 = vld [vmem:[#allocation6 + $0xa0] sm:$0xff]
    %v228 = vsel %vm146, %v222, 0
    %230 = vmatprep.subr.mxu0 0.0
    %231 = vmatpush1.msra.mxu0 %v223
    %232 = vmatprep.subr.mxu0 0.0
    %233 = vmatpush1.msra.mxu0 %v224
    %234 = vmatprep.subr.mxu0 0.0
    %235 = vmatpush1.msra.mxu0 %v225
    %236 = vmatprep.subr.mxu0 0.0
    %237 = vmatpush1.msra.mxu0 %v226
    %238 = vmatprep.subr.mxu0 0.0
    %239 = vmatpush1.msra.mxu0 0.0
    %240 = vmatprep.subr.mxu0 0.0
    %241 = vmatpush1.msra.mxu0 0.0
    %242 = vmatprep.subr.mxu0 0.0
    %243 = vmatpush1.msra.mxu0 0.0
    %244 = vmatprep.subr.mxu0 0.0
    %245 = vmatpush1.msra.mxu0 0.0
    %246 = vmatprep.subr.mxu0 0.0
    %247 = vmatpush1.msra.mxu0 0.0
    %248 = vmatprep.subr.mxu0 0.0
    %249 = vmatpush1.msra.mxu0 0.0
    %250 = vmatprep.subr.mxu0 0.0
    %251 = vmatpush1.msra.mxu0 0.0
    %252 = vmatprep.subr.mxu0 0.0
    %253 = vmatpush1.msra.mxu0 0.0
    %254 = vmatprep.subr.mxu0 0.0
    %255 = vmatpush1.msra.mxu0 0.0
    %256 = vmatprep.subr.mxu0 0.0
    %257 = vmatpush1.msra.mxu0 0.0
    %258 = vmatprep.subr.mxu0 0.0
    %259 = vmatpush1.msra.mxu0 0.0
    %260 = vmatprep.subr.mxu0 0.0
    %261 = vmatpush1.msra.mxu0 0.0
    %262 = vmatprep.subr.mxu0 0.0
    %263 = vmatpush1.msra.mxu0 0.0
    %264 = vmatprep.subr.mxu0 0.0
    %265 = vmatpush1.msra.mxu0 0.0
    %266 = vmatprep.subr.mxu0 0.0
    %267 = vmatpush1.msra.mxu0 0.0
    %268 = vmatprep.subr.mxu0 0.0
    %269 = vmatpush1.msra.mxu0 0.0
    %270 = vmatprep.subr.mxu0 0.0
    %271 = vmatpush1.msra.mxu0 0.0
    %272 = vmatprep.subr.mxu0 0.0
    %273 = vmatpush1.msra.mxu0 0.0
    %274 = vmatprep.subr.mxu0 0.0
    %275 = vmatpush1.msra.mxu0 0.0
    %276 = vmatprep.subr.mxu0 0.0
    %277 = vmatpush1.msra.mxu0 0.0
    %278 = vmatprep.subr.mxu0 0.0
    %279 = vmatpush1.msra.mxu0 0.0
    %280 = vmatprep.subr.mxu0 0.0
    %281 = vmatpush1.msra.mxu0 0.0
    %282 = vmatprep.subr.mxu0 0.0
    %283 = vmatpush1.msra.mxu0 0.0
    %284 = vmatprep.subr.mxu0 0.0
    %285 = vmatpush1.msra.mxu0 0.0
    %286 = vmatprep.subr.mxu0 0.0
    %287 = vmatpush1.msra.mxu0 0.0
    %288 = vmatprep.subr.mxu0 0.0
    %289 = vmatpush1.msra.mxu0 0.0
    %290 = vmatprep.subr.mxu0 0.0
    %291 = vmatpush1.msra.mxu0 0.0
    %292 = vmatprep.subr.mxu0 0.0
    %293 = vmatpush1.msra.mxu0 0.0
    %294 = vmatprep.mubr.f32.mxu0 0.0
    %295 = vmatmul.mubr.f32.gmra.mrb[0].mxu0 %v228
    %v296 = vpop.f32.mrb[0].mxu0
    %v297 = vadd.f32 %v45, %v296
    %v298 = vpop.f32.mrb[0].mxu0
    %299 = vdwg.mxu0
    %v300 = vld [vmem:[%s2] sm:$0x1]
    %v301 = vld [vmem:[%s2 + $0x1] sm:$0x1]
    %v303 = vlaneseq
    %v304 = vshrl.u32 %v303, 7
    %v305 = vsub.s32 0, %v304
    %v306 = vrot.slane %v47, %v305
    %v307 = vlaneseq
    %v308 = vshrl.u32 %v307, 7
    %v309 = vsub.s32 1, %v308
    %v310 = vrot.slane %v47, %v309
    %v314 = vsel %vm146, %v300, 0
    %316 = vmatprep.subr.mxu0 %v51
    %317 = vmatpush1.msra.mxu0 %v50
    %318 = vmatprep.subr.mxu0 %v53
    %319 = vmatpush1.msra.mxu0 %v52
    %320 = vmatprep.subr.mxu0 %v55
    %321 = vmatpush1.msra.mxu0 %v54
    %322 = vmatprep.subr.mxu0 %v57
    %323 = vmatpush1.msra.mxu0 %v56
    %324 = vmatprep.subr.mxu0 0.0
    %325 = vmatpush1.msra.mxu0 0.0
    %326 = vmatprep.subr.mxu0 0.0
    %327 = vmatpush1.msra.mxu0 0.0
    %328 = vmatprep.subr.mxu0 0.0
    %329 = vmatpush1.msra.mxu0 0.0
    %330 = vmatprep.subr.mxu0 0.0
    %331 = vmatpush1.msra.mxu0 0.0
    %332 = vmatprep.subr.mxu0 0.0
    %333 = vmatpush1.msra.mxu0 0.0
    %334 = vmatprep.subr.mxu0 0.0
    %335 = vmatpush1.msra.mxu0 0.0
    %336 = vmatprep.subr.mxu0 0.0
    %337 = vmatpush1.msra.mxu0 0.0
    %338 = vmatprep.subr.mxu0 0.0
    %339 = vmatpush1.msra.mxu0 0.0
    %340 = vmatprep.subr.mxu0 0.0
    %341 = vmatpush1.msra.mxu0 0.0
    %342 = vmatprep.subr.mxu0 0.0
    %343 = vmatpush1.msra.mxu0 0.0
    %344 = vmatprep.subr.mxu0 0.0
    %345 = vmatpush1.msra.mxu0 0.0
    %346 = vmatprep.subr.mxu0 0.0
    %347 = vmatpush1.msra.mxu0 0.0
    %348 = vmatprep.subr.mxu0 0.0
    %349 = vmatpush1.msra.mxu0 0.0
    %350 = vmatprep.subr.mxu0 0.0
    %351 = vmatpush1.msra.mxu0 0.0
    %352 = vmatprep.subr.mxu0 0.0
    %353 = vmatpush1.msra.mxu0 0.0
    %354 = vmatprep.subr.mxu0 0.0
    %355 = vmatpush1.msra.mxu0 0.0
    %356 = vmatprep.subr.mxu0 0.0
    %357 = vmatpush1.msra.mxu0 0.0
    %358 = vmatprep.subr.mxu0 0.0
    %359 = vmatpush1.msra.mxu0 0.0
    %360 = vmatprep.subr.mxu0 0.0
    %361 = vmatpush1.msra.mxu0 0.0
    %362 = vmatprep.subr.mxu0 0.0
    %363 = vmatpush1.msra.mxu0 0.0
    %364 = vmatprep.subr.mxu0 0.0
    %365 = vmatpush1.msra.mxu0 0.0
    %366 = vmatprep.subr.mxu0 0.0
    %367 = vmatpush1.msra.mxu0 0.0
    %368 = vmatprep.subr.mxu0 0.0
    %369 = vmatpush1.msra.mxu0 0.0
    %370 = vmatprep.subr.mxu0 0.0
    %371 = vmatpush1.msra.mxu0 0.0
    %372 = vmatprep.subr.mxu0 0.0
    %373 = vmatpush1.msra.mxu0 0.0
    %374 = vmatprep.subr.mxu0 0.0
    %375 = vmatpush1.msra.mxu0 0.0
    %376 = vmatprep.subr.mxu0 0.0
    %377 = vmatpush1.msra.mxu0 0.0
    %378 = vmatprep.subr.mxu0 0.0
    %379 = vmatpush1.msra.mxu0 0.0
    %380 = vmatprep.mubr.f32.mxu0 0.0
    %381 = vmatmul.mubr.f32.gmra.mrb[0].mxu0 %v314
    %v382 = vpop.f32.mrb[0].mxu0
    %v383 = vpop.f32.mrb[0].mxu0
    %v384 = vadd.f32 %v310, %v383
    %385 = vdwg.mxu0
    %v387 = vsel %vm146, %v301, 0
    %389 = vmatprep.subr.mxu0 0.0
    %390 = vmatpush1.msra.mxu0 %v58
    %391 = vmatprep.subr.mxu0 0.0
    %392 = vmatpush1.msra.mxu0 %v59
    %393 = vmatprep.subr.mxu0 0.0
    %394 = vmatpush1.msra.mxu0 %v60
    %395 = vmatprep.subr.mxu0 0.0
    %396 = vmatpush1.msra.mxu0 %v61
    %397 = vmatprep.subr.mxu0 0.0
    %398 = vmatpush1.msra.mxu0 0.0
    %399 = vmatprep.subr.mxu0 0.0
    %400 = vmatpush1.msra.mxu0 0.0
    %401 = vmatprep.subr.mxu0 0.0
    %402 = vmatpush1.msra.mxu0 0.0
    %403 = vmatprep.subr.mxu0 0.0
    %404 = vmatpush1.msra.mxu0 0.0
    %405 = vmatprep.subr.mxu0 0.0
    %406 = vmatpush1.msra.mxu0 0.0
    %407 = vmatprep.subr.mxu0 0.0
    %408 = vmatpush1.msra.mxu0 0.0
    %409 = vmatprep.subr.mxu0 0.0
    %410 = vmatpush1.msra.mxu0 0.0
    %411 = vmatprep.subr.mxu0 0.0
    %412 = vmatpush1.msra.mxu0 0.0
    %413 = vmatprep.subr.mxu0 0.0
    %414 = vmatpush1.msra.mxu0 0.0
    %415 = vmatprep.subr.mxu0 0.0
    %416 = vmatpush1.msra.mxu0 0.0
    %417 = vmatprep.subr.mxu0 0.0
    %418 = vmatpush1.msra.mxu0 0.0
    %419 = vmatprep.subr.mxu0 0.0
    %420 = vmatpush1.msra.mxu0 0.0
    %421 = vmatprep.subr.mxu0 0.0
    %422 = vmatpush1.msra.mxu0 0.0
    %423 = vmatprep.subr.mxu0 0.0
    %424 = vmatpush1.msra.mxu0 0.0
    %425 = vmatprep.subr.mxu0 0.0
    %426 = vmatpush1.msra.mxu0 0.0
    %427 = vmatprep.subr.mxu0 0.0
    %428 = vmatpush1.msra.mxu0 0.0
    %429 = vmatprep.subr.mxu0 0.0
    %430 = vmatpush1.msra.mxu0 0.0
    %431 = vmatprep.subr.mxu0 0.0
    %432 = vmatpush1.msra.mxu0 0.0
    %433 = vmatprep.subr.mxu0 0.0
    %434 = vmatpush1.msra.mxu0 0.0
    %435 = vmatprep.subr.mxu0 0.0
    %436 = vmatpush1.msra.mxu0 0.0
    %437 = vmatprep.subr.mxu0 0.0
    %438 = vmatpush1.msra.mxu0 0.0
    %439 = vmatprep.subr.mxu0 0.0
    %440 = vmatpush1.msra.mxu0 0.0
    %441 = vmatprep.subr.mxu0 0.0
    %442 = vmatpush1.msra.mxu0 0.0
    %443 = vmatprep.subr.mxu0 0.0
    %444 = vmatpush1.msra.mxu0 0.0
    %445 = vmatprep.subr.mxu0 0.0
    %446 = vmatpush1.msra.mxu0 0.0
    %447 = vmatprep.subr.mxu0 0.0
    %448 = vmatpush1.msra.mxu0 0.0
    %449 = vmatprep.subr.mxu0 0.0
    %450 = vmatpush1.msra.mxu0 0.0
    %451 = vmatprep.subr.mxu0 0.0
    %452 = vmatpush1.msra.mxu0 0.0
    %453 = vmatprep.mubr.f32.mxu0 0.0
    %454 = vmatmul.mubr.f32.gmra.mrb[0].mxu0 %v387
    %v455 = vpop.f32.mrb[0].mxu0
    %v456 = vadd.f32 %v48, %v455
    %v457 = vpop.f32.mrb[0].mxu0
    %458 = vdwg.mxu0
    %v459 = vadd.f32 %v297, %v384
    %v460 = vxor.u32 %v459, 2147483648
    %v461 = vmul.f32 %v460, 1.442695
    %v462 = vpow.pop %v461
    %v463 = vadd.f32 %v462, 1.0
    %v464 = vrcp.pop %v463
    %v465 = vmul.f32 1.0, %v464
    %467 = vrot.lane.b32.xlu0 %v384, 64
    %v468 = vpop.permute.xlu0 %467
    %v470 = vmul.f32 %v465, %v468
    %472 = vrot.lane.b32.xlu0 %v470, 64
    %v473 = vpop.permute.xlu0 %472
    %v475 = vadd.f32 %v297, %v473
    %v476 = vtanh.pop %v475
    %v477 = vsub.f32 1.0, %v465
    %479 = vrot.lane.b32.xlu0 %v476, 96
    %v480 = vpop.permute.xlu0 %479
    %v482 = vmul.f32 %v477, %v480
    %483 = vrot.lane.b32.xlu0 %v300, 32
    %v484 = vpop.permute.xlu0 %483
    %v486 = vmul.f32 %v465, %v484
    %v487 = vadd.f32 %v482, %v486
    %489 = vrot.lane.b32.xlu0 %v487, 96
    %v490 = vpop.permute.xlu0 %489
    %v491 = vsel %vm146, %v490, 0
    %493 = vmatprep.subr.mxu0 %v51
    %494 = vmatpush1.msra.mxu0 %v50
    %495 = vmatprep.subr.mxu0 %v53
    %496 = vmatpush1.msra.mxu0 %v52
    %497 = vmatprep.subr.mxu0 %v55
    %498 = vmatpush1.msra.mxu0 %v54
    %499 = vmatprep.subr.mxu0 %v57
    %500 = vmatpush1.msra.mxu0 %v56
    %501 = vmatprep.subr.mxu0 0.0
    %502 = vmatpush1.msra.mxu0 0.0
    %503 = vmatprep.subr.mxu0 0.0
    %504 = vmatpush1.msra.mxu0 0.0
    %505 = vmatprep.subr.mxu0 0.0
    %506 = vmatpush1.msra.mxu0 0.0
    %507 = vmatprep.subr.mxu0 0.0
    %508 = vmatpush1.msra.mxu0 0.0
    %509 = vmatprep.subr.mxu0 0.0
    %510 = vmatpush1.msra.mxu0 0.0
    %511 = vmatprep.subr.mxu0 0.0
    %512 = vmatpush1.msra.mxu0 0.0
    %513 = vmatprep.subr.mxu0 0.0
    %514 = vmatpush1.msra.mxu0 0.0
    %515 = vmatprep.subr.mxu0 0.0
    %516 = vmatpush1.msra.mxu0 0.0
    %517 = vmatprep.subr.mxu0 0.0
    %518 = vmatpush1.msra.mxu0 0.0
    %519 = vmatprep.subr.mxu0 0.0
    %520 = vmatpush1.msra.mxu0 0.0
    %521 = vmatprep.subr.mxu0 0.0
    %522 = vmatpush1.msra.mxu0 0.0
    %523 = vmatprep.subr.mxu0 0.0
    %524 = vmatpush1.msra.mxu0 0.0
    %525 = vmatprep.subr.mxu0 0.0
    %526 = vmatpush1.msra.mxu0 0.0
    %527 = vmatprep.subr.mxu0 0.0
    %528 = vmatpush1.msra.mxu0 0.0
    %529 = vmatprep.subr.mxu0 0.0
    %530 = vmatpush1.msra.mxu0 0.0
    %531 = vmatprep.subr.mxu0 0.0
    %532 = vmatpush1.msra.mxu0 0.0
    %533 = vmatprep.subr.mxu0 0.0
    %534 = vmatpush1.msra.mxu0 0.0
    %535 = vmatprep.subr.mxu0 0.0
    %536 = vmatpush1.msra.mxu0 0.0
    %537 = vmatprep.subr.mxu0 0.0
    %538 = vmatpush1.msra.mxu0 0.0
    %539 = vmatprep.subr.mxu0 0.0
    %540 = vmatpush1.msra.mxu0 0.0
    %541 = vmatprep.subr.mxu0 0.0
    %542 = vmatpush1.msra.mxu0 0.0
    %543 = vmatprep.subr.mxu0 0.0
    %544 = vmatpush1.msra.mxu0 0.0
    %545 = vmatprep.subr.mxu0 0.0
    %546 = vmatpush1.msra.mxu0 0.0
    %547 = vmatprep.subr.mxu0 0.0
    %548 = vmatpush1.msra.mxu0 0.0
    %549 = vmatprep.subr.mxu0 0.0
    %550 = vmatpush1.msra.mxu0 0.0
    %551 = vmatprep.subr.mxu0 0.0
    %552 = vmatpush1.msra.mxu0 0.0
    %553 = vmatprep.subr.mxu0 0.0
    %554 = vmatpush1.msra.mxu0 0.0
    %555 = vmatprep.subr.mxu0 0.0
    %556 = vmatpush1.msra.mxu0 0.0
    %557 = vmatprep.mubr.f32.mxu0 0.0
    %558 = vmatmul.mubr.f32.gmra.mrb[0].mxu0 %v491
    %v559 = vpop.f32.mrb[0].mxu0
    %v560 = vadd.f32 %v306, %v559
    %v561 = vpop.f32.mrb[0].mxu0
    %v562 = vadd.f32 %v310, %v561
    %563 = vdwg.mxu0
    %v564 = vadd.f32 %v560, %v456
    %v565 = vxor.u32 %v564, 2147483648
    %v566 = vmul.f32 %v565, 1.442695
    %v567 = vpow.pop %v566
    %v568 = vadd.f32 %v567, 1.0
    %v569 = vrcp.pop %v568
    %v570 = vmul.f32 1.0, %v569
    %572 = vrot.lane.b32.xlu0 %v456, 64
    %v573 = vpop.permute.xlu0 %572
    %v575 = vmul.f32 %v570, %v573
    %577 = vrot.lane.b32.xlu0 %v575, 64
    %v578 = vpop.permute.xlu0 %577
    %v580 = vadd.f32 %v560, %v578
    %v581 = vtanh.pop %v580
    %v582 = vsub.f32 1.0, %v570
    %584 = vrot.lane.b32.xlu0 %v581, 96
    %v585 = vpop.permute.xlu0 %584
    %v587 = vmul.f32 %v582, %v585
    %588 = vrot.lane.b32.xlu0 %v301, 32
    %v589 = vpop.permute.xlu0 %588
    %v591 = vmul.f32 %v570, %v589
    %v592 = vadd.f32 %v587, %v591
    %594 = vrot.lane.b32.xlu0 %v592, 96
    %v595 = vpop.permute.xlu0 %594
    %vm597 = vcmask 253952
    %598 = vst.msk [vmem:[#allocation2] sm:$0x1] %vm597, %v595
    %v599 = vsel %vm146, %v595, 0
    %601 = vmatprep.subr.mxu0 0.0
    %602 = vmatpush1.msra.mxu0 %v58
    %603 = vmatprep.subr.mxu0 0.0
    %604 = vmatpush1.msra.mxu0 %v59
    %605 = vmatprep.subr.mxu0 0.0
    %606 = vmatpush1.msra.mxu0 %v60
    %607 = vmatprep.subr.mxu0 0.0
    %608 = vmatpush1.msra.mxu0 %v61
    %609 = vmatprep.subr.mxu0 0.0
    %610 = vmatpush1.msra.mxu0 0.0
    %611 = vmatprep.subr.mxu0 0.0
    %612 = vmatpush1.msra.mxu0 0.0
    %613 = vmatprep.subr.mxu0 0.0
    %614 = vmatpush1.msra.mxu0 0.0
    %615 = vmatprep.subr.mxu0 0.0
    %616 = vmatpush1.msra.mxu0 0.0
    %617 = vmatprep.subr.mxu0 0.0
    %618 = vmatpush1.msra.mxu0 0.0
    %619 = vmatprep.subr.mxu0 0.0
    %620 = vmatpush1.msra.mxu0 0.0
    %621 = vmatprep.subr.mxu0 0.0
    %622 = vmatpush1.msra.mxu0 0.0
    %623 = vmatprep.subr.mxu0 0.0
    %624 = vmatpush1.msra.mxu0 0.0
    %625 = vmatprep.subr.mxu0 0.0
    %626 = vmatpush1.msra.mxu0 0.0
    %627 = vmatprep.subr.mxu0 0.0
    %628 = vmatpush1.msra.mxu0 0.0
    %629 = vmatprep.subr.mxu0 0.0
    %630 = vmatpush1.msra.mxu0 0.0
    %631 = vmatprep.subr.mxu0 0.0
    %632 = vmatpush1.msra.mxu0 0.0
    %633 = vmatprep.subr.mxu0 0.0
    %634 = vmatpush1.msra.mxu0 0.0
    %635 = vmatprep.subr.mxu0 0.0
    %636 = vmatpush1.msra.mxu0 0.0
    %637 = vmatprep.subr.mxu0 0.0
    %638 = vmatpush1.msra.mxu0 0.0
    %639 = vmatprep.subr.mxu0 0.0
    %640 = vmatpush1.msra.mxu0 0.0
    %641 = vmatprep.subr.mxu0 0.0
    %642 = vmatpush1.msra.mxu0 0.0
    %643 = vmatprep.subr.mxu0 0.0
    %644 = vmatpush1.msra.mxu0 0.0
    %645 = vmatprep.subr.mxu0 0.0
    %646 = vmatpush1.msra.mxu0 0.0
    %647 = vmatprep.subr.mxu0 0.0
    %648 = vmatpush1.msra.mxu0 0.0
    %649 = vmatprep.subr.mxu0 0.0
    %650 = vmatpush1.msra.mxu0 0.0
    %651 = vmatprep.subr.mxu0 0.0
    %652 = vmatpush1.msra.mxu0 0.0
    %653 = vmatprep.subr.mxu0 0.0
    %654 = vmatpush1.msra.mxu0 0.0
    %655 = vmatprep.subr.mxu0 0.0
    %656 = vmatpush1.msra.mxu0 0.0
    %657 = vmatprep.subr.mxu0 0.0
    %658 = vmatpush1.msra.mxu0 0.0
    %659 = vmatprep.subr.mxu0 0.0
    %660 = vmatpush1.msra.mxu0 0.0
    %661 = vmatprep.subr.mxu0 0.0
    %662 = vmatpush1.msra.mxu0 0.0
    %663 = vmatprep.subr.mxu0 0.0
    %664 = vmatpush1.msra.mxu0 0.0
    %665 = vmatprep.mubr.f32.mxu0 0.0
    %666 = vmatmul.mubr.f32.gmra.mrb[0].mxu0 %v599
    %v667 = vpop.f32.mrb[0].mxu0
    %v668 = vadd.f32 %v48, %v667
    %v669 = vpop.f32.mrb[0].mxu0
    %670 = vdwg.mxu0
    %v672 = vrot.slane %v562, 7
    %v674 = vadd.f32 %v297, %v672
    %v675 = vxor.u32 %v674, 2147483648
    %v676 = vmul.f32 %v675, 1.442695
    %v677 = vpow.pop %v676
    %v678 = vadd.f32 %v677, 1.0
    %v679 = vrcp.pop %v678
    %v680 = vmul.f32 1.0, %v679
    %681 = vrot.lane.b32.xlu0 %v672, 64
    %v682 = vpop.permute.xlu0 %681
    %v684 = vmul.f32 %v680, %v682
    %686 = vrot.lane.b32.xlu0 %v684, 64
    %v687 = vpop.permute.xlu0 %686
    %v689 = vadd.f32 %v297, %v687
    %v690 = vtanh.pop %v689
    %v691 = vsub.f32 1.0, %v680
    %693 = vrot.lane.b32.xlu0 %v690, 96
    %v694 = vpop.permute.xlu0 %693
    %v696 = vmul.f32 %v691, %v694
    %v697 = vrot.slane %v487, 7
    %v699 = vmul.f32 %v680, %v697
    %v700 = vadd.f32 %v696, %v699
    %v702 = vrot.slane %v700, 1
    %703 = vrot.lane.b32.xlu0 %v702, 96
    %v704 = vpop.permute.xlu0 %703
    %v705 = vsel %vm146, %v704, 0
    %707 = vmatprep.subr.mxu0 %v51
    %708 = vmatpush1.msra.mxu0 %v50
    %709 = vmatprep.subr.mxu0 %v53
    %710 = vmatpush1.msra.mxu0 %v52
    %711 = vmatprep.subr.mxu0 %v55
    %712 = vmatpush1.msra.mxu0 %v54
    %713 = vmatprep.subr.mxu0 %v57
    %714 = vmatpush1.msra.mxu0 %v56
    %715 = vmatprep.subr.mxu0 0.0
    %716 = vmatpush1.msra.mxu0 0.0
    %717 = vmatprep.subr.mxu0 0.0
    %718 = vmatpush1.msra.mxu0 0.0
    %719 = vmatprep.subr.mxu0 0.0
    %720 = vmatpush1.msra.mxu0 0.0
    %721 = vmatprep.subr.mxu0 0.0
    %722 = vmatpush1.msra.mxu0 0.0
    %723 = vmatprep.subr.mxu0 0.0
    %724 = vmatpush1.msra.mxu0 0.0
    %725 = vmatprep.subr.mxu0 0.0
    %726 = vmatpush1.msra.mxu0 0.0
    %727 = vmatprep.subr.mxu0 0.0
    %728 = vmatpush1.msra.mxu0 0.0
    %729 = vmatprep.subr.mxu0 0.0
    %730 = vmatpush1.msra.mxu0 0.0
    %731 = vmatprep.subr.mxu0 0.0
    %732 = vmatpush1.msra.mxu0 0.0
    %733 = vmatprep.subr.mxu0 0.0
    %734 = vmatpush1.msra.mxu0 0.0
    %735 = vmatprep.subr.mxu0 0.0
    %736 = vmatpush1.msra.mxu0 0.0
    %737 = vmatprep.subr.mxu0 0.0
    %738 = vmatpush1.msra.mxu0 0.0
    %739 = vmatprep.subr.mxu0 0.0
    %740 = vmatpush1.msra.mxu0 0.0
    %741 = vmatprep.subr.mxu0 0.0
    %742 = vmatpush1.msra.mxu0 0.0
    %743 = vmatprep.subr.mxu0 0.0
    %744 = vmatpush1.msra.mxu0 0.0
    %745 = vmatprep.subr.mxu0 0.0
    %746 = vmatpush1.msra.mxu0 0.0
    %747 = vmatprep.subr.mxu0 0.0
    %748 = vmatpush1.msra.mxu0 0.0
    %749 = vmatprep.subr.mxu0 0.0
    %750 = vmatpush1.msra.mxu0 0.0
    %751 = vmatprep.subr.mxu0 0.0
    %752 = vmatpush1.msra.mxu0 0.0
    %753 = vmatprep.subr.mxu0 0.0
    %754 = vmatpush1.msra.mxu0 0.0
    %755 = vmatprep.subr.mxu0 0.0
    %756 = vmatpush1.msra.mxu0 0.0
    %757 = vmatprep.subr.mxu0 0.0
    %758 = vmatpush1.msra.mxu0 0.0
    %759 = vmatprep.subr.mxu0 0.0
    %760 = vmatpush1.msra.mxu0 0.0
    %761 = vmatprep.subr.mxu0 0.0
    %762 = vmatpush1.msra.mxu0 0.0
    %763 = vmatprep.subr.mxu0 0.0
    %764 = vmatpush1.msra.mxu0 0.0
    %765 = vmatprep.subr.mxu0 0.0
    %766 = vmatpush1.msra.mxu0 0.0
    %767 = vmatprep.subr.mxu0 0.0
    %768 = vmatpush1.msra.mxu0 0.0
    %769 = vmatprep.subr.mxu0 0.0
    %770 = vmatpush1.msra.mxu0 0.0
    %771 = vmatprep.mubr.f32.mxu0 0.0
    %772 = vmatmul.mubr.f32.gmra.mrb[0].mxu0 %v705
    %v773 = vpop.f32.mrb[0].mxu0
    %v774 = vadd.f32 %v306, %v773
    %v775 = vpop.f32.mrb[0].mxu0
    %v776 = vadd.f32 %v310, %v775
    %777 = vdwg.mxu0
    %v778 = vadd.f32 %v774, %v668
    %v779 = vxor.u32 %v778, 2147483648
    %v780 = vmul.f32 %v779, 1.442695
    %v781 = vpow.pop %v780
    %v782 = vadd.f32 %v781, 1.0
    %v783 = vrcp.pop %v782
    %v784 = vmul.f32 1.0, %v783
    %786 = vrot.lane.b32.xlu0 %v668, 64
    %v787 = vpop.permute.xlu0 %786
    %v789 = vmul.f32 %v784, %v787
    %791 = vrot.lane.b32.xlu0 %v789, 64
    %v792 = vpop.permute.xlu0 %791
    %v794 = vadd.f32 %v774, %v792
    %v795 = vtanh.pop %v794
    %v796 = vsub.f32 1.0, %v784
    %798 = vrot.lane.b32.xlu0 %v795, 96
    %v799 = vpop.permute.xlu0 %798
    %v801 = vmul.f32 %v796, %v799
    %v802 = vmul.f32 %v784, %v592
    %v803 = vadd.f32 %v801, %v802
    %805 = vrot.lane.b32.xlu0 %v803, 96
    %v806 = vpop.permute.xlu0 %805
    %808 = vst.msk [vmem:[#allocation2 + $0x1] sm:$0x1] %vm597, %v806
    %v809 = vsel %vm146, %v806, 0
    %811 = vmatprep.subr.mxu0 0.0
    %812 = vmatpush1.msra.mxu0 %v58
    %813 = vmatprep.subr.mxu0 0.0
    %814 = vmatpush1.msra.mxu0 %v59
    %815 = vmatprep.subr.mxu0 0.0
    %816 = vmatpush1.msra.mxu0 %v60
    %817 = vmatprep.subr.mxu0 0.0
    %818 = vmatpush1.msra.mxu0 %v61
    %819 = vmatprep.subr.mxu0 0.0
    %820 = vmatpush1.msra.mxu0 0.0
    %821 = vmatprep.subr.mxu0 0.0
    %822 = vmatpush1.msra.mxu0 0.0
    %823 = vmatprep.subr.mxu0 0.0
    %824 = vmatpush1.msra.mxu0 0.0
    %825 = vmatprep.subr.mxu0 0.0
    %826 = vmatpush1.msra.mxu0 0.0
    %827 = vmatprep.subr.mxu0 0.0
    %828 = vmatpush1.msra.mxu0 0.0
    %829 = vmatprep.subr.mxu0 0.0
    %830 = vmatpush1.msra.mxu0 0.0
    %831 = vmatprep.subr.mxu0 0.0
    %832 = vmatpush1.msra.mxu0 0.0
    %833 = vmatprep.subr.mxu0 0.0
    %834 = vmatpush1.msra.mxu0 0.0
    %835 = vmatprep.subr.mxu0 0.0
    %836 = vmatpush1.msra.mxu0 0.0
    %837 = vmatprep.subr.mxu0 0.0
    %838 = vmatpush1.msra.mxu0 0.0
    %839 = vmatprep.subr.mxu0 0.0
    %840 = vmatpush1.msra.mxu0 0.0
    %841 = vmatprep.subr.mxu0 0.0
    %842 = vmatpush1.msra.mxu0 0.0
    %843 = vmatprep.subr.mxu0 0.0
    %844 = vmatpush1.msra.mxu0 0.0
    %845 = vmatprep.subr.mxu0 0.0
    %846 = vmatpush1.msra.mxu0 0.0
    %847 = vmatprep.subr.mxu0 0.0
    %848 = vmatpush1.msra.mxu0 0.0
    %849 = vmatprep.subr.mxu0 0.0
    %850 = vmatpush1.msra.mxu0 0.0
    %851 = vmatprep.subr.mxu0 0.0
    %852 = vmatpush1.msra.mxu0 0.0
    %853 = vmatprep.subr.mxu0 0.0
    %854 = vmatpush1.msra.mxu0 0.0
    %855 = vmatprep.subr.mxu0 0.0
    %856 = vmatpush1.msra.mxu0 0.0
    %857 = vmatprep.subr.mxu0 0.0
    %858 = vmatpush1.msra.mxu0 0.0
    %859 = vmatprep.subr.mxu0 0.0
    %860 = vmatpush1.msra.mxu0 0.0
    %861 = vmatprep.subr.mxu0 0.0
    %862 = vmatpush1.msra.mxu0 0.0
    %863 = vmatprep.subr.mxu0 0.0
    %864 = vmatpush1.msra.mxu0 0.0
    %865 = vmatprep.subr.mxu0 0.0
    %866 = vmatpush1.msra.mxu0 0.0
    %867 = vmatprep.subr.mxu0 0.0
    %868 = vmatpush1.msra.mxu0 0.0
    %869 = vmatprep.subr.mxu0 0.0
    %870 = vmatpush1.msra.mxu0 0.0
    %871 = vmatprep.subr.mxu0 0.0
    %872 = vmatpush1.msra.mxu0 0.0
    %873 = vmatprep.subr.mxu0 0.0
    %874 = vmatpush1.msra.mxu0 0.0
    %875 = vmatprep.mubr.f32.mxu0 0.0
    %876 = vmatmul.mubr.f32.gmra.mrb[0].mxu0 %v809
    %v877 = vpop.f32.mrb[0].mxu0
    %v878 = vadd.f32 %v48, %v877
    %v879 = vpop.f32.mrb[0].mxu0
    %880 = vdwg.mxu0
    %v882 = vrot.slane %v776, 6
    %v884 = vadd.f32 %v297, %v882
    %v885 = vxor.u32 %v884, 2147483648
    %v886 = vmul.f32 %v885, 1.442695
    %v887 = vpow.pop %v886
    %v888 = vadd.f32 %v887, 1.0
    %v889 = vrcp.pop %v888
    %v890 = vmul.f32 1.0, %v889
    %891 = vrot.lane.b32.xlu0 %v882, 64
    %v892 = vpop.permute.xlu0 %891
    %v894 = vmul.f32 %v890, %v892
    %896 = vrot.lane.b32.xlu0 %v894, 64
    %v897 = vpop.permute.xlu0 %896
    %v899 = vadd.f32 %v297, %v897
    %v900 = vtanh.pop %v899
    %v901 = vsub.f32 1.0, %v890
    %903 = vrot.lane.b32.xlu0 %v900, 96
    %v904 = vpop.permute.xlu0 %903
    %v906 = vmul.f32 %v901, %v904
    %v907 = vrot.slane %v700, 7
    %v909 = vmul.f32 %v890, %v907
    %v910 = vadd.f32 %v906, %v909
    %v912 = vrot.slane %v910, 2
    %913 = vrot.lane.b32.xlu0 %v912, 96
    %v914 = vpop.permute.xlu0 %913
    %v915 = vsel %vm146, %v914, 0
    %917 = vmatprep.subr.mxu0 %v51
    %918 = vmatpush1.msra.mxu0 %v50
    %919 = vmatprep.subr.mxu0 %v53
    %920 = vmatpush1.msra.mxu0 %v52
    %921 = vmatprep.subr.mxu0 %v55
    %922 = vmatpush1.msra.mxu0 %v54
    %923 = vmatprep.subr.mxu0 %v57
    %924 = vmatpush1.msra.mxu0 %v56
    %925 = vmatprep.subr.mxu0 0.0
    %926 = vmatpush1.msra.mxu0 0.0
    %927 = vmatprep.subr.mxu0 0.0
    %928 = vmatpush1.msra.mxu0 0.0
    %929 = vmatprep.subr.mxu0 0.0
    %930 = vmatpush1.msra.mxu0 0.0
    %931 = vmatprep.subr.mxu0 0.0
    %932 = vmatpush1.msra.mxu0 0.0
    %933 = vmatprep.subr.mxu0 0.0
    %934 = vmatpush1.msra.mxu0 0.0
    %935 = vmatprep.subr.mxu0 0.0
    %936 = vmatpush1.msra.mxu0 0.0
    %937 = vmatprep.subr.mxu0 0.0
    %938 = vmatpush1.msra.mxu0 0.0
    %939 = vmatprep.subr.mxu0 0.0
    %940 = vmatpush1.msra.mxu0 0.0
    %941 = vmatprep.subr.mxu0 0.0
    %942 = vmatpush1.msra.mxu0 0.0
    %943 = vmatprep.subr.mxu0 0.0
    %944 = vmatpush1.msra.mxu0 0.0
    %945 = vmatprep.subr.mxu0 0.0
    %946 = vmatpush1.msra.mxu0 0.0
    %947 = vmatprep.subr.mxu0 0.0
    %948 = vmatpush1.msra.mxu0 0.0
    %949 = vmatprep.subr.mxu0 0.0
    %950 = vmatpush1.msra.mxu0 0.0
    %951 = vmatprep.subr.mxu0 0.0
    %952 = vmatpush1.msra.mxu0 0.0
    %953 = vmatprep.subr.mxu0 0.0
    %954 = vmatpush1.msra.mxu0 0.0
    %955 = vmatprep.subr.mxu0 0.0
    %956 = vmatpush1.msra.mxu0 0.0
    %957 = vmatprep.subr.mxu0 0.0
    %958 = vmatpush1.msra.mxu0 0.0
    %959 = vmatprep.subr.mxu0 0.0
    %960 = vmatpush1.msra.mxu0 0.0
    %961 = vmatprep.subr.mxu0 0.0
    %962 = vmatpush1.msra.mxu0 0.0
    %963 = vmatprep.subr.mxu0 0.0
    %964 = vmatpush1.msra.mxu0 0.0
    %965 = vmatprep.subr.mxu0 0.0
    %966 = vmatpush1.msra.mxu0 0.0
    %967 = vmatprep.subr.mxu0 0.0
    %968 = vmatpush1.msra.mxu0 0.0
    %969 = vmatprep.subr.mxu0 0.0
    %970 = vmatpush1.msra.mxu0 0.0
    %971 = vmatprep.subr.mxu0 0.0
    %972 = vmatpush1.msra.mxu0 0.0
    %973 = vmatprep.subr.mxu0 0.0
    %974 = vmatpush1.msra.mxu0 0.0
    %975 = vmatprep.subr.mxu0 0.0
    %976 = vmatpush1.msra.mxu0 0.0
    %977 = vmatprep.subr.mxu0 0.0
    %978 = vmatpush1.msra.mxu0 0.0
    %979 = vmatprep.subr.mxu0 0.0
    %980 = vmatpush1.msra.mxu0 0.0
    %981 = vmatprep.mubr.f32.mxu0 0.0
    %982 = vmatmul.mubr.f32.gmra.mrb[0].mxu0 %v915
    %v983 = vpop.f32.mrb[0].mxu0
    %v984 = vadd.f32 %v306, %v983
    %v985 = vpop.f32.mrb[0].mxu0
    %v986 = vadd.f32 %v310, %v985
    %987 = vdwg.mxu0
    %v988 = vadd.f32 %v984, %v878
    %v989 = vxor.u32 %v988, 2147483648
    %v990 = vmul.f32 %v989, 1.442695
    %v991 = vpow.pop %v990
    %v992 = vadd.f32 %v991, 1.0
    %v993 = vrcp.pop %v992
    %v994 = vmul.f32 1.0, %v993
    %996 = vrot.lane.b32.xlu0 %v878, 64
    %v997 = vpop.permute.xlu0 %996
    %v999 = vmul.f32 %v994, %v997
    %1001 = vrot.lane.b32.xlu0 %v999, 64
    %v1002 = vpop.permute.xlu0 %1001
    %v1004 = vadd.f32 %v984, %v1002
    %v1005 = vtanh.pop %v1004
    %v1006 = vsub.f32 1.0, %v994
    %1008 = vrot.lane.b32.xlu0 %v1005, 96
    %v1009 = vpop.permute.xlu0 %1008
    %v1011 = vmul.f32 %v1006, %v1009
    %v1012 = vmul.f32 %v994, %v803
    %v1013 = vadd.f32 %v1011, %v1012
    %1015 = vrot.lane.b32.xlu0 %v1013, 96
    %v1016 = vpop.permute.xlu0 %1015
    %1018 = vst.msk [vmem:[#allocation2 + $0x2] sm:$0x1] %vm597, %v1016
    %v1019 = vsel %vm146, %v1016, 0
    %1021 = vmatprep.subr.mxu0 0.0
    %1022 = vmatpush1.msra.mxu0 %v58
    %1023 = vmatprep.subr.mxu0 0.0
    %1024 = vmatpush1.msra.mxu0 %v59
    %1025 = vmatprep.subr.mxu0 0.0
    %1026 = vmatpush1.msra.mxu0 %v60
    %1027 = vmatprep.subr.mxu0 0.0
    %1028 = vmatpush1.msra.mxu0 %v61
    %1029 = vmatprep.subr.mxu0 0.0
    %1030 = vmatpush1.msra.mxu0 0.0
    %1031 = vmatprep.subr.mxu0 0.0
    %1032 = vmatpush1.msra.mxu0 0.0
    %1033 = vmatprep.subr.mxu0 0.0
    %1034 = vmatpush1.msra.mxu0 0.0
    %1035 = vmatprep.subr.mxu0 0.0
    %1036 = vmatpush1.msra.mxu0 0.0
    %1037 = vmatprep.subr.mxu0 0.0
    %1038 = vmatpush1.msra.mxu0 0.0
    %1039 = vmatprep.subr.mxu0 0.0
    %1040 = vmatpush1.msra.mxu0 0.0
    %1041 = vmatprep.subr.mxu0 0.0
    %1042 = vmatpush1.msra.mxu0 0.0
    %1043 = vmatprep.subr.mxu0 0.0
    %1044 = vmatpush1.msra.mxu0 0.0
    %1045 = vmatprep.subr.mxu0 0.0
    %1046 = vmatpush1.msra.mxu0 0.0
    %1047 = vmatprep.subr.mxu0 0.0
    %1048 = vmatpush1.msra.mxu0 0.0
    %1049 = vmatprep.subr.mxu0 0.0
    %1050 = vmatpush1.msra.mxu0 0.0
    %1051 = vmatprep.subr.mxu0 0.0
    %1052 = vmatpush1.msra.mxu0 0.0
    %1053 = vmatprep.subr.mxu0 0.0
    %1054 = vmatpush1.msra.mxu0 0.0
    %1055 = vmatprep.subr.mxu0 0.0
    %1056 = vmatpush1.msra.mxu0 0.0
    %1057 = vmatprep.subr.mxu0 0.0
    %1058 = vmatpush1.msra.mxu0 0.0
    %1059 = vmatprep.subr.mxu0 0.0
    %1060 = vmatpush1.msra.mxu0 0.0
    %1061 = vmatprep.subr.mxu0 0.0
    %1062 = vmatpush1.msra.mxu0 0.0
    %1063 = vmatprep.subr.mxu0 0.0
    %1064 = vmatpush1.msra.mxu0 0.0
    %1065 = vmatprep.subr.mxu0 0.0
    %1066 = vmatpush1.msra.mxu0 0.0
    %1067 = vmatprep.subr.mxu0 0.0
    %1068 = vmatpush1.msra.mxu0 0.0
    %1069 = vmatprep.subr.mxu0 0.0
    %1070 = vmatpush1.msra.mxu0 0.0
    %1071 = vmatprep.subr.mxu0 0.0
    %1072 = vmatpush1.msra.mxu0 0.0
    %1073 = vmatprep.subr.mxu0 0.0
    %1074 = vmatpush1.msra.mxu0 0.0
    %1075 = vmatprep.subr.mxu0 0.0
    %1076 = vmatpush1.msra.mxu0 0.0
    %1077 = vmatprep.subr.mxu0 0.0
    %1078 = vmatpush1.msra.mxu0 0.0
    %1079 = vmatprep.subr.mxu0 0.0
    %1080 = vmatpush1.msra.mxu0 0.0
    %1081 = vmatprep.subr.mxu0 0.0
    %1082 = vmatpush1.msra.mxu0 0.0
    %1083 = vmatprep.subr.mxu0 0.0
    %1084 = vmatpush1.msra.mxu0 0.0
    %1085 = vmatprep.mubr.f32.mxu0 0.0
    %1086 = vmatmul.mubr.f32.gmra.mrb[0].mxu0 %v1019
    %v1087 = vpop.f32.mrb[0].mxu0
    %v1088 = vadd.f32 %v48, %v1087
    %v1089 = vpop.f32.mrb[0].mxu0
    %1090 = vdwg.mxu0
    %v1092 = vrot.slane %v986, 5
    %v1094 = vadd.f32 %v297, %v1092
    %v1095 = vxor.u32 %v1094, 2147483648
    %v1096 = vmul.f32 %v1095, 1.442695
    %v1097 = vpow.pop %v1096
    %v1098 = vadd.f32 %v1097, 1.0
    %v1099 = vrcp.pop %v1098
    %v1100 = vmul.f32 1.0, %v1099
    %1101 = vrot.lane.b32.xlu0 %v1092, 64
    %v1102 = vpop.permute.xlu0 %1101
    %v1104 = vmul.f32 %v1100, %v1102
    %1106 = vrot.lane.b32.xlu0 %v1104, 64
    %v1107 = vpop.permute.xlu0 %1106
    %v1109 = vadd.f32 %v297, %v1107
    %v1110 = vtanh.pop %v1109
    %v1111 = vsub.f32 1.0, %v1100
    %1113 = vrot.lane.b32.xlu0 %v1110, 96
    %v1114 = vpop.permute.xlu0 %1113
    %v1116 = vmul.f32 %v1111, %v1114
    %v1117 = vrot.slane %v910, 7
    %v1119 = vmul.f32 %v1100, %v1117
    %v1120 = vadd.f32 %v1116, %v1119
    %v1122 = vrot.slane %v1120, 3
    %1123 = vrot.lane.b32.xlu0 %v1122, 96
    %v1124 = vpop.permute.xlu0 %1123
    %v1125 = vsel %vm146, %v1124, 0
    %1127 = vmatprep.subr.mxu0 %v51
    %1128 = vmatpush1.msra.mxu0 %v50
    %1129 = vmatprep.subr.mxu0 %v53
    %1130 = vmatpush1.msra.mxu0 %v52
    %1131 = vmatprep.subr.mxu0 %v55
    %1132 = vmatpush1.msra.mxu0 %v54
    %1133 = vmatprep.subr.mxu0 %v57
    %1134 = vmatpush1.msra.mxu0 %v56
    %1135 = vmatprep.subr.mxu0 0.0
    %1136 = vmatpush1.msra.mxu0 0.0
    %1137 = vmatprep.subr.mxu0 0.0
    %1138 = vmatpush1.msra.mxu0 0.0
    %1139 = vmatprep.subr.mxu0 0.0
    %1140 = vmatpush1.msra.mxu0 0.0
    %1141 = vmatprep.subr.mxu0 0.0
    %1142 = vmatpush1.msra.mxu0 0.0
    %1143 = vmatprep.subr.mxu0 0.0
    %1144 = vmatpush1.msra.mxu0 0.0
    %1145 = vmatprep.subr.mxu0 0.0
    %1146 = vmatpush1.msra.mxu0 0.0
    %1147 = vmatprep.subr.mxu0 0.0
    %1148 = vmatpush1.msra.mxu0 0.0
    %1149 = vmatprep.subr.mxu0 0.0
    %1150 = vmatpush1.msra.mxu0 0.0
    %1151 = vmatprep.subr.mxu0 0.0
    %1152 = vmatpush1.msra.mxu0 0.0
    %1153 = vmatprep.subr.mxu0 0.0
    %1154 = vmatpush1.msra.mxu0 0.0
    %1155 = vmatprep.subr.mxu0 0.0
    %1156 = vmatpush1.msra.mxu0 0.0
    %1157 = vmatprep.subr.mxu0 0.0
    %1158 = vmatpush1.msra.mxu0 0.0
    %1159 = vmatprep.subr.mxu0 0.0
    %1160 = vmatpush1.msra.mxu0 0.0
    %1161 = vmatprep.subr.mxu0 0.0
    %1162 = vmatpush1.msra.mxu0 0.0
    %1163 = vmatprep.subr.mxu0 0.0
    %1164 = vmatpush1.msra.mxu0 0.0
    %1165 = vmatprep.subr.mxu0 0.0
    %1166 = vmatpush1.msra.mxu0 0.0
    %1167 = vmatprep.subr.mxu0 0.0
    %1168 = vmatpush1.msra.mxu0 0.0
    %1169 = vmatprep.subr.mxu0 0.0
    %1170 = vmatpush1.msra.mxu0 0.0
    %1171 = vmatprep.subr.mxu0 0.0
    %1172 = vmatpush1.msra.mxu0 0.0
    %1173 = vmatprep.subr.mxu0 0.0
    %1174 = vmatpush1.msra.mxu0 0.0
    %1175 = vmatprep.subr.mxu0 0.0
    %1176 = vmatpush1.msra.mxu0 0.0
    %1177 = vmatprep.subr.mxu0 0.0
    %1178 = vmatpush1.msra.mxu0 0.0
    %1179 = vmatprep.subr.mxu0 0.0
    %1180 = vmatpush1.msra.mxu0 0.0
    %1181 = vmatprep.subr.mxu0 0.0
    %1182 = vmatpush1.msra.mxu0 0.0
    %1183 = vmatprep.subr.mxu0 0.0
    %1184 = vmatpush1.msra.mxu0 0.0
    %1185 = vmatprep.subr.mxu0 0.0
    %1186 = vmatpush1.msra.mxu0 0.0
    %1187 = vmatprep.subr.mxu0 0.0
    %1188 = vmatpush1.msra.mxu0 0.0
    %1189 = vmatprep.subr.mxu0 0.0
    %1190 = vmatpush1.msra.mxu0 0.0
    %1191 = vmatprep.mubr.f32.mxu0 0.0
    %1192 = vmatmul.mubr.f32.gmra.mrb[0].mxu0 %v1125
    %v1193 = vpop.f32.mrb[0].mxu0
    %v1194 = vadd.f32 %v306, %v1193
    %v1195 = vpop.f32.mrb[0].mxu0
    %v1196 = vadd.f32 %v310, %v1195
    %1197 = vdwg.mxu0
    %v1198 = vadd.f32 %v1194, %v1088
    %v1199 = vxor.u32 %v1198, 2147483648
    %v1200 = vmul.f32 %v1199, 1.442695
    %v1201 = vpow.pop %v1200
    %v1202 = vadd.f32 %v1201, 1.0
    %v1203 = vrcp.pop %v1202
    %v1204 = vmul.f32 1.0, %v1203
    %1206 = vrot.lane.b32.xlu0 %v1088, 64
    %v1207 = vpop.permute.xlu0 %1206
    %v1209 = vmul.f32 %v1204, %v1207
    %1211 = vrot.lane.b32.xlu0 %v1209, 64
    %v1212 = vpop.permute.xlu0 %1211
    %v1214 = vadd.f32 %v1194, %v1212
    %v1215 = vtanh.pop %v1214
    %v1216 = vsub.f32 1.0, %v1204
    %1218 = vrot.lane.b32.xlu0 %v1215, 96
    %v1219 = vpop.permute.xlu0 %1218
    %v1221 = vmul.f32 %v1216, %v1219
    %v1222 = vmul.f32 %v1204, %v1013
    %v1223 = vadd.f32 %v1221, %v1222
    %1225 = vrot.lane.b32.xlu0 %v1223, 96
    %v1226 = vpop.permute.xlu0 %1225
    %1228 = vst.msk [vmem:[#allocation2 + $0x3] sm:$0x1] %vm597, %v1226
    %v1229 = vsel %vm146, %v1226, 0
    %1231 = vmatprep.subr.mxu0 0.0
    %1232 = vmatpush1.msra.mxu0 %v58
    %1233 = vmatprep.subr.mxu0 0.0
    %1234 = vmatpush1.msra.mxu0 %v59
    %1235 = vmatprep.subr.mxu0 0.0
    %1236 = vmatpush1.msra.mxu0 %v60
    %1237 = vmatprep.subr.mxu0 0.0
    %1238 = vmatpush1.msra.mxu0 %v61
    %1239 = vmatprep.subr.mxu0 0.0
    %1240 = vmatpush1.msra.mxu0 0.0
    %1241 = vmatprep.subr.mxu0 0.0
    %1242 = vmatpush1.msra.mxu0 0.0
    %1243 = vmatprep.subr.mxu0 0.0
    %1244 = vmatpush1.msra.mxu0 0.0
    %1245 = vmatprep.subr.mxu0 0.0
    %1246 = vmatpush1.msra.mxu0 0.0
    %1247 = vmatprep.subr.mxu0 0.0
    %1248 = vmatpush1.msra.mxu0 0.0
    %1249 = vmatprep.subr.mxu0 0.0
    %1250 = vmatpush1.msra.mxu0 0.0
    %1251 = vmatprep.subr.mxu0 0.0
    %1252 = vmatpush1.msra.mxu0 0.0
    %1253 = vmatprep.subr.mxu0 0.0
    %1254 = vmatpush1.msra.mxu0 0.0
    %1255 = vmatprep.subr.mxu0 0.0
    %1256 = vmatpush1.msra.mxu0 0.0
    %1257 = vmatprep.subr.mxu0 0.0
    %1258 = vmatpush1.msra.mxu0 0.0
    %1259 = vmatprep.subr.mxu0 0.0
    %1260 = vmatpush1.msra.mxu0 0.0
    %1261 = vmatprep.subr.mxu0 0.0
    %1262 = vmatpush1.msra.mxu0 0.0
    %1263 = vmatprep.subr.mxu0 0.0
    %1264 = vmatpush1.msra.mxu0 0.0
    %1265 = vmatprep.subr.mxu0 0.0
    %1266 = vmatpush1.msra.mxu0 0.0
    %1267 = vmatprep.subr.mxu0 0.0
    %1268 = vmatpush1.msra.mxu0 0.0
    %1269 = vmatprep.subr.mxu0 0.0
    %1270 = vmatpush1.msra.mxu0 0.0
    %1271 = vmatprep.subr.mxu0 0.0
    %1272 = vmatpush1.msra.mxu0 0.0
    %1273 = vmatprep.subr.mxu0 0.0
    %1274 = vmatpush1.msra.mxu0 0.0
    %1275 = vmatprep.subr.mxu0 0.0
    %1276 = vmatpush1.msra.mxu0 0.0
    %1277 = vmatprep.subr.mxu0 0.0
    %1278 = vmatpush1.msra.mxu0 0.0
    %1279 = vmatprep.subr.mxu0 0.0
    %1280 = vmatpush1.msra.mxu0 0.0
    %1281 = vmatprep.subr.mxu0 0.0
    %1282 = vmatpush1.msra.mxu0 0.0
    %1283 = vmatprep.subr.mxu0 0.0
    %1284 = vmatpush1.msra.mxu0 0.0
    %1285 = vmatprep.subr.mxu0 0.0
    %1286 = vmatpush1.msra.mxu0 0.0
    %1287 = vmatprep.subr.mxu0 0.0
    %1288 = vmatpush1.msra.mxu0 0.0
    %1289 = vmatprep.subr.mxu0 0.0
    %1290 = vmatpush1.msra.mxu0 0.0
    %1291 = vmatprep.subr.mxu0 0.0
    %1292 = vmatpush1.msra.mxu0 0.0
    %1293 = vmatprep.subr.mxu0 0.0
    %1294 = vmatpush1.msra.mxu0 0.0
    %1295 = vmatprep.mubr.f32.mxu0 0.0
    %1296 = vmatmul.mubr.f32.gmra.mrb[0].mxu0 %v1229
    %v1297 = vpop.f32.mrb[0].mxu0
    %v1298 = vadd.f32 %v48, %v1297
    %v1299 = vpop.f32.mrb[0].mxu0
    %1300 = vdwg.mxu0
    %v1302 = vrot.slane %v1196, 4
    %v1304 = vadd.f32 %v297, %v1302
    %v1305 = vxor.u32 %v1304, 2147483648
    %v1306 = vmul.f32 %v1305, 1.442695
    %v1307 = vpow.pop %v1306
    %v1308 = vadd.f32 %v1307, 1.0
    %v1309 = vrcp.pop %v1308
    %v1310 = vmul.f32 1.0, %v1309
    %1311 = vrot.lane.b32.xlu0 %v1302, 64
    %v1312 = vpop.permute.xlu0 %1311
    %v1314 = vmul.f32 %v1310, %v1312
    %1316 = vrot.lane.b32.xlu0 %v1314, 64
    %v1317 = vpop.permute.xlu0 %1316
    %v1319 = vadd.f32 %v297, %v1317
    %v1320 = vtanh.pop %v1319
    %v1321 = vsub.f32 1.0, %v1310
    %1323 = vrot.lane.b32.xlu0 %v1320, 96
    %v1324 = vpop.permute.xlu0 %1323
    %v1326 = vmul.f32 %v1321, %v1324
    %v1327 = vrot.slane %v1120, 7
    %v1329 = vmul.f32 %v1310, %v1327
    %v1330 = vadd.f32 %v1326, %v1329
    %v1332 = vrot.slane %v1330, 4
    %1333 = vrot.lane.b32.xlu0 %v1332, 96
    %v1334 = vpop.permute.xlu0 %1333
    %v1335 = vsel %vm146, %v1334, 0
    %1337 = vmatprep.subr.mxu0 %v51
    %1338 = vmatpush1.msra.mxu0 %v50
    %1339 = vmatprep.subr.mxu0 %v53
    %1340 = vmatpush1.msra.mxu0 %v52
    %1341 = vmatprep.subr.mxu0 %v55
    %1342 = vmatpush1.msra.mxu0 %v54
    %1343 = vmatprep.subr.mxu0 %v57
    %1344 = vmatpush1.msra.mxu0 %v56
    %1345 = vmatprep.subr.mxu0 0.0
    %1346 = vmatpush1.msra.mxu0 0.0
    %1347 = vmatprep.subr.mxu0 0.0
    %1348 = vmatpush1.msra.mxu0 0.0
    %1349 = vmatprep.subr.mxu0 0.0
    %1350 = vmatpush1.msra.mxu0 0.0
    %1351 = vmatprep.subr.mxu0 0.0
    %1352 = vmatpush1.msra.mxu0 0.0
    %1353 = vmatprep.subr.mxu0 0.0
    %1354 = vmatpush1.msra.mxu0 0.0
    %1355 = vmatprep.subr.mxu0 0.0
    %1356 = vmatpush1.msra.mxu0 0.0
    %1357 = vmatprep.subr.mxu0 0.0
    %1358 = vmatpush1.msra.mxu0 0.0
    %1359 = vmatprep.subr.mxu0 0.0
    %1360 = vmatpush1.msra.mxu0 0.0
    %1361 = vmatprep.subr.mxu0 0.0
    %1362 = vmatpush1.msra.mxu0 0.0
    %1363 = vmatprep.subr.mxu0 0.0
    %1364 = vmatpush1.msra.mxu0 0.0
    %1365 = vmatprep.subr.mxu0 0.0
    %1366 = vmatpush1.msra.mxu0 0.0
    %1367 = vmatprep.subr.mxu0 0.0
    %1368 = vmatpush1.msra.mxu0 0.0
    %1369 = vmatprep.subr.mxu0 0.0
    %1370 = vmatpush1.msra.mxu0 0.0
    %1371 = vmatprep.subr.mxu0 0.0
    %1372 = vmatpush1.msra.mxu0 0.0
    %1373 = vmatprep.subr.mxu0 0.0
    %1374 = vmatpush1.msra.mxu0 0.0
    %1375 = vmatprep.subr.mxu0 0.0
    %1376 = vmatpush1.msra.mxu0 0.0
    %1377 = vmatprep.subr.mxu0 0.0
    %1378 = vmatpush1.msra.mxu0 0.0
    %1379 = vmatprep.subr.mxu0 0.0
    %1380 = vmatpush1.msra.mxu0 0.0
    %1381 = vmatprep.subr.mxu0 0.0
    %1382 = vmatpush1.msra.mxu0 0.0
    %1383 = vmatprep.subr.mxu0 0.0
    %1384 = vmatpush1.msra.mxu0 0.0
    %1385 = vmatprep.subr.mxu0 0.0
    %1386 = vmatpush1.msra.mxu0 0.0
    %1387 = vmatprep.subr.mxu0 0.0
    %1388 = vmatpush1.msra.mxu0 0.0
    %1389 = vmatprep.subr.mxu0 0.0
    %1390 = vmatpush1.msra.mxu0 0.0
    %1391 = vmatprep.subr.mxu0 0.0
    %1392 = vmatpush1.msra.mxu0 0.0
    %1393 = vmatprep.subr.mxu0 0.0
    %1394 = vmatpush1.msra.mxu0 0.0
    %1395 = vmatprep.subr.mxu0 0.0
    %1396 = vmatpush1.msra.mxu0 0.0
    %1397 = vmatprep.subr.mxu0 0.0
    %1398 = vmatpush1.msra.mxu0 0.0
    %1399 = vmatprep.subr.mxu0 0.0
    %1400 = vmatpush1.msra.mxu0 0.0
    %1401 = vmatprep.mubr.f32.mxu0 0.0
    %1402 = vmatmul.mubr.f32.gmra.mrb[0].mxu0 %v1335
    %v1403 = vpop.f32.mrb[0].mxu0
    %v1404 = vadd.f32 %v306, %v1403
    %v1405 = vpop.f32.mrb[0].mxu0
    %v1406 = vadd.f32 %v310, %v1405
    %1407 = vdwg.mxu0
    %v1408 = vadd.f32 %v1404, %v1298
    %v1409 = vxor.u32 %v1408, 2147483648
    %v1410 = vmul.f32 %v1409, 1.442695
    %v1411 = vpow.pop %v1410
    %v1412 = vadd.f32 %v1411, 1.0
    %v1413 = vrcp.pop %v1412
    %v1414 = vmul.f32 1.0, %v1413
    %1416 = vrot.lane.b32.xlu0 %v1298, 64
    %v1417 = vpop.permute.xlu0 %1416
    %v1419 = vmul.f32 %v1414, %v1417
    %1421 = vrot.lane.b32.xlu0 %v1419, 64
    %v1422 = vpop.permute.xlu0 %1421
    %v1424 = vadd.f32 %v1404, %v1422
    %v1425 = vtanh.pop %v1424
    %v1426 = vsub.f32 1.0, %v1414
    %1428 = vrot.lane.b32.xlu0 %v1425, 96
    %v1429 = vpop.permute.xlu0 %1428
    %v1431 = vmul.f32 %v1426, %v1429
    %v1432 = vmul.f32 %v1414, %v1223
    %v1433 = vadd.f32 %v1431, %v1432
    %1435 = vrot.lane.b32.xlu0 %v1433, 96
    %v1436 = vpop.permute.xlu0 %1435
    %1438 = vst.msk [vmem:[#allocation2 + $0x4] sm:$0x1] %vm597, %v1436
    %v1439 = vsel %vm146, %v1436, 0
    %1441 = vmatprep.subr.mxu0 0.0
    %1442 = vmatpush1.msra.mxu0 %v58
    %1443 = vmatprep.subr.mxu0 0.0
    %1444 = vmatpush1.msra.mxu0 %v59
    %1445 = vmatprep.subr.mxu0 0.0
    %1446 = vmatpush1.msra.mxu0 %v60
    %1447 = vmatprep.subr.mxu0 0.0
    %1448 = vmatpush1.msra.mxu0 %v61
    %1449 = vmatprep.subr.mxu0 0.0
    %1450 = vmatpush1.msra.mxu0 0.0
    %1451 = vmatprep.subr.mxu0 0.0
    %1452 = vmatpush1.msra.mxu0 0.0
    %1453 = vmatprep.subr.mxu0 0.0
    %1454 = vmatpush1.msra.mxu0 0.0
    %1455 = vmatprep.subr.mxu0 0.0
    %1456 = vmatpush1.msra.mxu0 0.0
    %1457 = vmatprep.subr.mxu0 0.0
    %1458 = vmatpush1.msra.mxu0 0.0
    %1459 = vmatprep.subr.mxu0 0.0
    %1460 = vmatpush1.msra.mxu0 0.0
    %1461 = vmatprep.subr.mxu0 0.0
    %1462 = vmatpush1.msra.mxu0 0.0
    %1463 = vmatprep.subr.mxu0 0.0
    %1464 = vmatpush1.msra.mxu0 0.0
    %1465 = vmatprep.subr.mxu0 0.0
    %1466 = vmatpush1.msra.mxu0 0.0
    %1467 = vmatprep.subr.mxu0 0.0
    %1468 = vmatpush1.msra.mxu0 0.0
    %1469 = vmatprep.subr.mxu0 0.0
    %1470 = vmatpush1.msra.mxu0 0.0
    %1471 = vmatprep.subr.mxu0 0.0
    %1472 = vmatpush1.msra.mxu0 0.0
    %1473 = vmatprep.subr.mxu0 0.0
    %1474 = vmatpush1.msra.mxu0 0.0
    %1475 = vmatprep.subr.mxu0 0.0
    %1476 = vmatpush1.msra.mxu0 0.0
    %1477 = vmatprep.subr.mxu0 0.0
    %1478 = vmatpush1.msra.mxu0 0.0
    %1479 = vmatprep.subr.mxu0 0.0
    %1480 = vmatpush1.msra.mxu0 0.0
    %1481 = vmatprep.subr.mxu0 0.0
    %1482 = vmatpush1.msra.mxu0 0.0
    %1483 = vmatprep.subr.mxu0 0.0
    %1484 = vmatpush1.msra.mxu0 0.0
    %1485 = vmatprep.subr.mxu0 0.0
    %1486 = vmatpush1.msra.mxu0 0.0
    %1487 = vmatprep.subr.mxu0 0.0
    %1488 = vmatpush1.msra.mxu0 0.0
    %1489 = vmatprep.subr.mxu0 0.0
    %1490 = vmatpush1.msra.mxu0 0.0
    %1491 = vmatprep.subr.mxu0 0.0
    %1492 = vmatpush1.msra.mxu0 0.0
    %1493 = vmatprep.subr.mxu0 0.0
    %1494 = vmatpush1.msra.mxu0 0.0
    %1495 = vmatprep.subr.mxu0 0.0
    %1496 = vmatpush1.msra.mxu0 0.0
    %1497 = vmatprep.subr.mxu0 0.0
    %1498 = vmatpush1.msra.mxu0 0.0
    %1499 = vmatprep.subr.mxu0 0.0
    %1500 = vmatpush1.msra.mxu0 0.0
    %1501 = vmatprep.subr.mxu0 0.0
    %1502 = vmatpush1.msra.mxu0 0.0
    %1503 = vmatprep.subr.mxu0 0.0
    %1504 = vmatpush1.msra.mxu0 0.0
    %1505 = vmatprep.mubr.f32.mxu0 0.0
    %1506 = vmatmul.mubr.f32.gmra.mrb[0].mxu0 %v1439
    %v1507 = vpop.f32.mrb[0].mxu0
    %v1508 = vadd.f32 %v48, %v1507
    %v1509 = vpop.f32.mrb[0].mxu0
    %1510 = vdwg.mxu0
    %v1512 = vrot.slane %v1406, 3
    %v1514 = vadd.f32 %v297, %v1512
    %v1515 = vxor.u32 %v1514, 2147483648
    %v1516 = vmul.f32 %v1515, 1.442695
    %v1517 = vpow.pop %v1516
    %v1518 = vadd.f32 %v1517, 1.0
    %v1519 = vrcp.pop %v1518
    %v1520 = vmul.f32 1.0, %v1519
    %1521 = vrot.lane.b32.xlu0 %v1512, 64
    %v1522 = vpop.permute.xlu0 %1521
    %v1524 = vmul.f32 %v1520, %v1522
    %1526 = vrot.lane.b32.xlu0 %v1524, 64
    %v1527 = vpop.permute.xlu0 %1526
    %v1529 = vadd.f32 %v297, %v1527
    %v1530 = vtanh.pop %v1529
    %v1531 = vsub.f32 1.0, %v1520
    %1533 = vrot.lane.b32.xlu0 %v1530, 96
    %v1534 = vpop.permute.xlu0 %1533
    %v1536 = vmul.f32 %v1531, %v1534
    %v1537 = vrot.slane %v1330, 7
    %v1539 = vmul.f32 %v1520, %v1537
    %v1540 = vadd.f32 %v1536, %v1539
    %v1542 = vrot.slane %v1540, 5
    %1543 = vrot.lane.b32.xlu0 %v1542, 96
    %v1544 = vpop.permute.xlu0 %1543
    %v1545 = vsel %vm146, %v1544, 0
    %1547 = vmatprep.subr.mxu0 %v51
    %1548 = vmatpush1.msra.mxu0 %v50
    %1549 = vmatprep.subr.mxu0 %v53
    %1550 = vmatpush1.msra.mxu0 %v52
    %1551 = vmatprep.subr.mxu0 %v55
    %1552 = vmatpush1.msra.mxu0 %v54
    %1553 = vmatprep.subr.mxu0 %v57
    %1554 = vmatpush1.msra.mxu0 %v56
    %1555 = vmatprep.subr.mxu0 0.0
    %1556 = vmatpush1.msra.mxu0 0.0
    %1557 = vmatprep.subr.mxu0 0.0
    %1558 = vmatpush1.msra.mxu0 0.0
    %1559 = vmatprep.subr.mxu0 0.0
    %1560 = vmatpush1.msra.mxu0 0.0
    %1561 = vmatprep.subr.mxu0 0.0
    %1562 = vmatpush1.msra.mxu0 0.0
    %1563 = vmatprep.subr.mxu0 0.0
    %1564 = vmatpush1.msra.mxu0 0.0
    %1565 = vmatprep.subr.mxu0 0.0
    %1566 = vmatpush1.msra.mxu0 0.0
    %1567 = vmatprep.subr.mxu0 0.0
    %1568 = vmatpush1.msra.mxu0 0.0
    %1569 = vmatprep.subr.mxu0 0.0
    %1570 = vmatpush1.msra.mxu0 0.0
    %1571 = vmatprep.subr.mxu0 0.0
    %1572 = vmatpush1.msra.mxu0 0.0
    %1573 = vmatprep.subr.mxu0 0.0
    %1574 = vmatpush1.msra.mxu0 0.0
    %1575 = vmatprep.subr.mxu0 0.0
    %1576 = vmatpush1.msra.mxu0 0.0
    %1577 = vmatprep.subr.mxu0 0.0
    %1578 = vmatpush1.msra.mxu0 0.0
    %1579 = vmatprep.subr.mxu0 0.0
    %1580 = vmatpush1.msra.mxu0 0.0
    %1581 = vmatprep.subr.mxu0 0.0
    %1582 = vmatpush1.msra.mxu0 0.0
    %1583 = vmatprep.subr.mxu0 0.0
    %1584 = vmatpush1.msra.mxu0 0.0
    %1585 = vmatprep.subr.mxu0 0.0
    %1586 = vmatpush1.msra.mxu0 0.0
    %1587 = vmatprep.subr.mxu0 0.0
    %1588 = vmatpush1.msra.mxu0 0.0
    %1589 = vmatprep.subr.mxu0 0.0
    %1590 = vmatpush1.msra.mxu0 0.0
    %1591 = vmatprep.subr.mxu0 0.0
    %1592 = vmatpush1.msra.mxu0 0.0
    %1593 = vmatprep.subr.mxu0 0.0
    %1594 = vmatpush1.msra.mxu0 0.0
    %1595 = vmatprep.subr.mxu0 0.0
    %1596 = vmatpush1.msra.mxu0 0.0
    %1597 = vmatprep.subr.mxu0 0.0
    %1598 = vmatpush1.msra.mxu0 0.0
    %1599 = vmatprep.subr.mxu0 0.0
    %1600 = vmatpush1.msra.mxu0 0.0
    %1601 = vmatprep.subr.mxu0 0.0
    %1602 = vmatpush1.msra.mxu0 0.0
    %1603 = vmatprep.subr.mxu0 0.0
    %1604 = vmatpush1.msra.mxu0 0.0
    %1605 = vmatprep.subr.mxu0 0.0
    %1606 = vmatpush1.msra.mxu0 0.0
    %1607 = vmatprep.subr.mxu0 0.0
    %1608 = vmatpush1.msra.mxu0 0.0
    %1609 = vmatprep.subr.mxu0 0.0
    %1610 = vmatpush1.msra.mxu0 0.0
    %1611 = vmatprep.mubr.f32.mxu0 0.0
    %1612 = vmatmul.mubr.f32.gmra.mrb[0].mxu0 %v1545
    %v1613 = vpop.f32.mrb[0].mxu0
    %v1614 = vadd.f32 %v306, %v1613
    %v1615 = vpop.f32.mrb[0].mxu0
    %v1616 = vadd.f32 %v310, %v1615
    %1617 = vdwg.mxu0
    %v1618 = vadd.f32 %v1614, %v1508
    %v1619 = vxor.u32 %v1618, 2147483648
    %v1620 = vmul.f32 %v1619, 1.442695
    %v1621 = vpow.pop %v1620
    %v1622 = vadd.f32 %v1621, 1.0
    %v1623 = vrcp.pop %v1622
    %v1624 = vmul.f32 1.0, %v1623
    %1626 = vrot.lane.b32.xlu0 %v1508, 64
    %v1627 = vpop.permute.xlu0 %1626
    %v1629 = vmul.f32 %v1624, %v1627
    %1631 = vrot.lane.b32.xlu0 %v1629, 64
    %v1632 = vpop.permute.xlu0 %1631
    %v1634 = vadd.f32 %v1614, %v1632
    %v1635 = vtanh.pop %v1634
    %v1636 = vsub.f32 1.0, %v1624
    %1638 = vrot.lane.b32.xlu0 %v1635, 96
    %v1639 = vpop.permute.xlu0 %1638
    %v1641 = vmul.f32 %v1636, %v1639
    %v1642 = vmul.f32 %v1624, %v1433
    %v1643 = vadd.f32 %v1641, %v1642
    %1645 = vrot.lane.b32.xlu0 %v1643, 96
    %v1646 = vpop.permute.xlu0 %1645
    %1648 = vst.msk [vmem:[#allocation2 + $0x5] sm:$0x1] %vm597, %v1646
    %v1649 = vsel %vm146, %v1646, 0
    %1651 = vmatprep.subr.mxu0 0.0
    %1652 = vmatpush1.msra.mxu0 %v58
    %1653 = vmatprep.subr.mxu0 0.0
    %1654 = vmatpush1.msra.mxu0 %v59
    %1655 = vmatprep.subr.mxu0 0.0
    %1656 = vmatpush1.msra.mxu0 %v60
    %1657 = vmatprep.subr.mxu0 0.0
    %1658 = vmatpush1.msra.mxu0 %v61
    %1659 = vmatprep.subr.mxu0 0.0
    %1660 = vmatpush1.msra.mxu0 0.0
    %1661 = vmatprep.subr.mxu0 0.0
    %1662 = vmatpush1.msra.mxu0 0.0
    %1663 = vmatprep.subr.mxu0 0.0
    %1664 = vmatpush1.msra.mxu0 0.0
    %1665 = vmatprep.subr.mxu0 0.0
    %1666 = vmatpush1.msra.mxu0 0.0
    %1667 = vmatprep.subr.mxu0 0.0
    %1668 = vmatpush1.msra.mxu0 0.0
    %1669 = vmatprep.subr.mxu0 0.0
    %1670 = vmatpush1.msra.mxu0 0.0
    %1671 = vmatprep.subr.mxu0 0.0
    %1672 = vmatpush1.msra.mxu0 0.0
    %1673 = vmatprep.subr.mxu0 0.0
    %1674 = vmatpush1.msra.mxu0 0.0
    %1675 = vmatprep.subr.mxu0 0.0
    %1676 = vmatpush1.msra.mxu0 0.0
    %1677 = vmatprep.subr.mxu0 0.0
    %1678 = vmatpush1.msra.mxu0 0.0
    %1679 = vmatprep.subr.mxu0 0.0
    %1680 = vmatpush1.msra.mxu0 0.0
    %1681 = vmatprep.subr.mxu0 0.0
    %1682 = vmatpush1.msra.mxu0 0.0
    %1683 = vmatprep.subr.mxu0 0.0
    %1684 = vmatpush1.msra.mxu0 0.0
    %1685 = vmatprep.subr.mxu0 0.0
    %1686 = vmatpush1.msra.mxu0 0.0
    %1687 = vmatprep.subr.mxu0 0.0
    %1688 = vmatpush1.msra.mxu0 0.0
    %1689 = vmatprep.subr.mxu0 0.0
    %1690 = vmatpush1.msra.mxu0 0.0
    %1691 = vmatprep.subr.mxu0 0.0
    %1692 = vmatpush1.msra.mxu0 0.0
    %1693 = vmatprep.subr.mxu0 0.0
    %1694 = vmatpush1.msra.mxu0 0.0
    %1695 = vmatprep.subr.mxu0 0.0
    %1696 = vmatpush1.msra.mxu0 0.0
    %1697 = vmatprep.subr.mxu0 0.0
    %1698 = vmatpush1.msra.mxu0 0.0
    %1699 = vmatprep.subr.mxu0 0.0
    %1700 = vmatpush1.msra.mxu0 0.0
    %1701 = vmatprep.subr.mxu0 0.0
    %1702 = vmatpush1.msra.mxu0 0.0
    %1703 = vmatprep.subr.mxu0 0.0
    %1704 = vmatpush1.msra.mxu0 0.0
    %1705 = vmatprep.subr.mxu0 0.0
    %1706 = vmatpush1.msra.mxu0 0.0
    %1707 = vmatprep.subr.mxu0 0.0
    %1708 = vmatpush1.msra.mxu0 0.0
    %1709 = vmatprep.subr.mxu0 0.0
    %1710 = vmatpush1.msra.mxu0 0.0
    %1711 = vmatprep.subr.mxu0 0.0
    %1712 = vmatpush1.msra.mxu0 0.0
    %1713 = vmatprep.subr.mxu0 0.0
    %1714 = vmatpush1.msra.mxu0 0.0
    %1715 = vmatprep.mubr.f32.mxu0 0.0
    %1716 = vmatmul.mubr.f32.gmra.mrb[0].mxu0 %v1649
    %v1717 = vpop.f32.mrb[0].mxu0
    %v1718 = vadd.f32 %v48, %v1717
    %v1719 = vpop.f32.mrb[0].mxu0
    %1720 = vdwg.mxu0
    %v1722 = vrot.slane %v1616, 2
    %v1724 = vadd.f32 %v297, %v1722
    %v1725 = vxor.u32 %v1724, 2147483648
    %v1726 = vmul.f32 %v1725, 1.442695
    %v1727 = vpow.pop %v1726
    %v1728 = vadd.f32 %v1727, 1.0
    %v1729 = vrcp.pop %v1728
    %v1730 = vmul.f32 1.0, %v1729
    %1731 = vrot.lane.b32.xlu0 %v1722, 64
    %v1732 = vpop.permute.xlu0 %1731
    %v1734 = vmul.f32 %v1730, %v1732
    %1736 = vrot.lane.b32.xlu0 %v1734, 64
    %v1737 = vpop.permute.xlu0 %1736
    %v1739 = vadd.f32 %v297, %v1737
    %v1740 = vtanh.pop %v1739
    %v1741 = vsub.f32 1.0, %v1730
    %1743 = vrot.lane.b32.xlu0 %v1740, 96
    %v1744 = vpop.permute.xlu0 %1743
    %v1746 = vmul.f32 %v1741, %v1744
    %v1747 = vrot.slane %v1540, 7
    %v1749 = vmul.f32 %v1730, %v1747
    %v1750 = vadd.f32 %v1746, %v1749
    %v1752 = vrot.slane %v1750, 6
    %1753 = vrot.lane.b32.xlu0 %v1752, 96
    %v1754 = vpop.permute.xlu0 %1753
    %v1755 = vsel %vm146, %v1754, 0
    %1757 = vmatprep.subr.mxu0 %v51
    %1758 = vmatpush1.msra.mxu0 %v50
    %1759 = vmatprep.subr.mxu0 %v53
    %1760 = vmatpush1.msra.mxu0 %v52
    %1761 = vmatprep.subr.mxu0 %v55
    %1762 = vmatpush1.msra.mxu0 %v54
    %1763 = vmatprep.subr.mxu0 %v57
    %1764 = vmatpush1.msra.mxu0 %v56
    %1765 = vmatprep.subr.mxu0 0.0
    %1766 = vmatpush1.msra.mxu0 0.0
    %1767 = vmatprep.subr.mxu0 0.0
    %1768 = vmatpush1.msra.mxu0 0.0
    %1769 = vmatprep.subr.mxu0 0.0
    %1770 = vmatpush1.msra.mxu0 0.0
    %1771 = vmatprep.subr.mxu0 0.0
    %1772 = vmatpush1.msra.mxu0 0.0
    %1773 = vmatprep.subr.mxu0 0.0
    %1774 = vmatpush1.msra.mxu0 0.0
    %1775 = vmatprep.subr.mxu0 0.0
    %1776 = vmatpush1.msra.mxu0 0.0
    %1777 = vmatprep.subr.mxu0 0.0
    %1778 = vmatpush1.msra.mxu0 0.0
    %1779 = vmatprep.subr.mxu0 0.0
    %1780 = vmatpush1.msra.mxu0 0.0
    %1781 = vmatprep.subr.mxu0 0.0
    %1782 = vmatpush1.msra.mxu0 0.0
    %1783 = vmatprep.subr.mxu0 0.0
    %1784 = vmatpush1.msra.mxu0 0.0
    %1785 = vmatprep.subr.mxu0 0.0
    %1786 = vmatpush1.msra.mxu0 0.0
    %1787 = vmatprep.subr.mxu0 0.0
    %1788 = vmatpush1.msra.mxu0 0.0
    %1789 = vmatprep.subr.mxu0 0.0
    %1790 = vmatpush1.msra.mxu0 0.0
    %1791 = vmatprep.subr.mxu0 0.0
    %1792 = vmatpush1.msra.mxu0 0.0
    %1793 = vmatprep.subr.mxu0 0.0
    %1794 = vmatpush1.msra.mxu0 0.0
    %1795 = vmatprep.subr.mxu0 0.0
    %1796 = vmatpush1.msra.mxu0 0.0
    %1797 = vmatprep.subr.mxu0 0.0
    %1798 = vmatpush1.msra.mxu0 0.0
    %1799 = vmatprep.subr.mxu0 0.0
    %1800 = vmatpush1.msra.mxu0 0.0
    %1801 = vmatprep.subr.mxu0 0.0
    %1802 = vmatpush1.msra.mxu0 0.0
    %1803 = vmatprep.subr.mxu0 0.0
    %1804 = vmatpush1.msra.mxu0 0.0
    %1805 = vmatprep.subr.mxu0 0.0
    %1806 = vmatpush1.msra.mxu0 0.0
    %1807 = vmatprep.subr.mxu0 0.0
    %1808 = vmatpush1.msra.mxu0 0.0
    %1809 = vmatprep.subr.mxu0 0.0
    %1810 = vmatpush1.msra.mxu0 0.0
    %1811 = vmatprep.subr.mxu0 0.0
    %1812 = vmatpush1.msra.mxu0 0.0
    %1813 = vmatprep.subr.mxu0 0.0
    %1814 = vmatpush1.msra.mxu0 0.0
    %1815 = vmatprep.subr.mxu0 0.0
    %1816 = vmatpush1.msra.mxu0 0.0
    %1817 = vmatprep.subr.mxu0 0.0
    %1818 = vmatpush1.msra.mxu0 0.0
    %1819 = vmatprep.subr.mxu0 0.0
    %1820 = vmatpush1.msra.mxu0 0.0
    %1821 = vmatprep.mubr.f32.mxu0 0.0
    %1822 = vmatmul.mubr.f32.gmra.mrb[0].mxu0 %v1755
    %v1823 = vpop.f32.mrb[0].mxu0
    %v1824 = vadd.f32 %v306, %v1823
    %v1825 = vpop.f32.mrb[0].mxu0
    %v1826 = vadd.f32 %v310, %v1825
    %1827 = vdwg.mxu0
    %v1828 = vadd.f32 %v1824, %v1718
    %v1829 = vxor.u32 %v1828, 2147483648
    %v1830 = vmul.f32 %v1829, 1.442695
    %v1831 = vpow.pop %v1830
    %v1832 = vadd.f32 %v1831, 1.0
    %v1833 = vrcp.pop %v1832
    %v1834 = vmul.f32 1.0, %v1833
    %1836 = vrot.lane.b32.xlu0 %v1718, 64
    %v1837 = vpop.permute.xlu0 %1836
    %v1839 = vmul.f32 %v1834, %v1837
    %1841 = vrot.lane.b32.xlu0 %v1839, 64
    %v1842 = vpop.permute.xlu0 %1841
    %v1844 = vadd.f32 %v1824, %v1842
    %v1845 = vtanh.pop %v1844
    %v1846 = vsub.f32 1.0, %v1834
    %1848 = vrot.lane.b32.xlu0 %v1845, 96
    %v1849 = vpop.permute.xlu0 %1848
    %v1851 = vmul.f32 %v1846, %v1849
    %v1852 = vmul.f32 %v1834, %v1643
    %v1853 = vadd.f32 %v1851, %v1852
    %1855 = vrot.lane.b32.xlu0 %v1853, 96
    %v1856 = vpop.permute.xlu0 %1855
    %1858 = vst.msk [vmem:[#allocation2 + $0x6] sm:$0x1] %vm597, %v1856
    %v1859 = vsel %vm146, %v1856, 0
    %1861 = vmatprep.subr.mxu0 0.0
    %1862 = vmatpush1.msra.mxu0 %v58
    %1863 = vmatprep.subr.mxu0 0.0
    %1864 = vmatpush1.msra.mxu0 %v59
    %1865 = vmatprep.subr.mxu0 0.0
    %1866 = vmatpush1.msra.mxu0 %v60
    %1867 = vmatprep.subr.mxu0 0.0
    %1868 = vmatpush1.msra.mxu0 %v61
    %1869 = vmatprep.subr.mxu0 0.0
    %1870 = vmatpush1.msra.mxu0 0.0
    %1871 = vmatprep.subr.mxu0 0.0
    %1872 = vmatpush1.msra.mxu0 0.0
    %1873 = vmatprep.subr.mxu0 0.0
    %1874 = vmatpush1.msra.mxu0 0.0
    %1875 = vmatprep.subr.mxu0 0.0
    %1876 = vmatpush1.msra.mxu0 0.0
    %1877 = vmatprep.subr.mxu0 0.0
    %1878 = vmatpush1.msra.mxu0 0.0
    %1879 = vmatprep.subr.mxu0 0.0
    %1880 = vmatpush1.msra.mxu0 0.0
    %1881 = vmatprep.subr.mxu0 0.0
    %1882 = vmatpush1.msra.mxu0 0.0
    %1883 = vmatprep.subr.mxu0 0.0
    %1884 = vmatpush1.msra.mxu0 0.0
    %1885 = vmatprep.subr.mxu0 0.0
    %1886 = vmatpush1.msra.mxu0 0.0
    %1887 = vmatprep.subr.mxu0 0.0
    %1888 = vmatpush1.msra.mxu0 0.0
    %1889 = vmatprep.subr.mxu0 0.0
    %1890 = vmatpush1.msra.mxu0 0.0
    %1891 = vmatprep.subr.mxu0 0.0
    %1892 = vmatpush1.msra.mxu0 0.0
    %1893 = vmatprep.subr.mxu0 0.0
    %1894 = vmatpush1.msra.mxu0 0.0
    %1895 = vmatprep.subr.mxu0 0.0
    %1896 = vmatpush1.msra.mxu0 0.0
    %1897 = vmatprep.subr.mxu0 0.0
    %1898 = vmatpush1.msra.mxu0 0.0
    %1899 = vmatprep.subr.mxu0 0.0
    %1900 = vmatpush1.msra.mxu0 0.0
    %1901 = vmatprep.subr.mxu0 0.0
    %1902 = vmatpush1.msra.mxu0 0.0
    %1903 = vmatprep.subr.mxu0 0.0
    %1904 = vmatpush1.msra.mxu0 0.0
    %1905 = vmatprep.subr.mxu0 0.0
    %1906 = vmatpush1.msra.mxu0 0.0
    %1907 = vmatprep.subr.mxu0 0.0
    %1908 = vmatpush1.msra.mxu0 0.0
    %1909 = vmatprep.subr.mxu0 0.0
    %1910 = vmatpush1.msra.mxu0 0.0
    %1911 = vmatprep.subr.mxu0 0.0
    %1912 = vmatpush1.msra.mxu0 0.0
    %1913 = vmatprep.subr.mxu0 0.0
    %1914 = vmatpush1.msra.mxu0 0.0
    %1915 = vmatprep.subr.mxu0 0.0
    %1916 = vmatpush1.msra.mxu0 0.0
    %1917 = vmatprep.subr.mxu0 0.0
    %1918 = vmatpush1.msra.mxu0 0.0
    %1919 = vmatprep.subr.mxu0 0.0
    %1920 = vmatpush1.msra.mxu0 0.0
    %1921 = vmatprep.subr.mxu0 0.0
    %1922 = vmatpush1.msra.mxu0 0.0
    %1923 = vmatprep.subr.mxu0 0.0
    %1924 = vmatpush1.msra.mxu0 0.0
    %1925 = vmatprep.mubr.f32.mxu0 0.0
    %1926 = vmatmul.mubr.f32.gmra.mrb[0].mxu0 %v1859
    %v1927 = vpop.f32.mrb[0].mxu0
    %v1928 = vadd.f32 %v48, %v1927
    %v1929 = vpop.f32.mrb[0].mxu0
    %1930 = vdwg.mxu0
    %v1932 = vrot.slane %v1826, 1
    %v1934 = vadd.f32 %v297, %v1932
    %v1935 = vxor.u32 %v1934, 2147483648
    %v1936 = vmul.f32 %v1935, 1.442695
    %v1937 = vpow.pop %v1936
    %v1938 = vadd.f32 %v1937, 1.0
    %v1939 = vrcp.pop %v1938
    %v1940 = vmul.f32 1.0, %v1939
    %1941 = vrot.lane.b32.xlu0 %v1932, 64
    %v1942 = vpop.permute.xlu0 %1941
    %v1944 = vmul.f32 %v1940, %v1942
    %1946 = vrot.lane.b32.xlu0 %v1944, 64
    %v1947 = vpop.permute.xlu0 %1946
    %v1949 = vadd.f32 %v297, %v1947
    %v1950 = vtanh.pop %v1949
    %v1951 = vsub.f32 1.0, %v1940
    %1953 = vrot.lane.b32.xlu0 %v1950, 96
    %v1954 = vpop.permute.xlu0 %1953
    %v1956 = vmul.f32 %v1951, %v1954
    %v1957 = vrot.slane %v1750, 7
    %v1959 = vmul.f32 %v1940, %v1957
    %v1960 = vadd.f32 %v1956, %v1959
    %v1962 = vrot.slane %v1960, 7
    %1963 = vrot.lane.b32.xlu0 %v1962, 96
    %v1964 = vpop.permute.xlu0 %1963
    %v1965 = vsel %vm146, %v1964, 0
    %1967 = vmatprep.subr.mxu0 %v51
    %1968 = vmatpush1.msra.mxu0 %v50
    %1969 = vmatprep.subr.mxu0 %v53
    %1970 = vmatpush1.msra.mxu0 %v52
    %1971 = vmatprep.subr.mxu0 %v55
    %1972 = vmatpush1.msra.mxu0 %v54
    %1973 = vmatprep.subr.mxu0 %v57
    %1974 = vmatpush1.msra.mxu0 %v56
    %1975 = vmatprep.subr.mxu0 0.0
    %1976 = vmatpush1.msra.mxu0 0.0
    %1977 = vmatprep.subr.mxu0 0.0
    %1978 = vmatpush1.msra.mxu0 0.0
    %1979 = vmatprep.subr.mxu0 0.0
    %1980 = vmatpush1.msra.mxu0 0.0
    %1981 = vmatprep.subr.mxu0 0.0
    %1982 = vmatpush1.msra.mxu0 0.0
    %1983 = vmatprep.subr.mxu0 0.0
    %1984 = vmatpush1.msra.mxu0 0.0
    %1985 = vmatprep.subr.mxu0 0.0
    %1986 = vmatpush1.msra.mxu0 0.0
    %1987 = vmatprep.subr.mxu0 0.0
    %1988 = vmatpush1.msra.mxu0 0.0
    %1989 = vmatprep.subr.mxu0 0.0
    %1990 = vmatpush1.msra.mxu0 0.0
    %1991 = vmatprep.subr.mxu0 0.0
    %1992 = vmatpush1.msra.mxu0 0.0
    %1993 = vmatprep.subr.mxu0 0.0
    %1994 = vmatpush1.msra.mxu0 0.0
    %1995 = vmatprep.subr.mxu0 0.0
    %1996 = vmatpush1.msra.mxu0 0.0
    %1997 = vmatprep.subr.mxu0 0.0
    %1998 = vmatpush1.msra.mxu0 0.0
    %1999 = vmatprep.subr.mxu0 0.0
    %2000 = vmatpush1.msra.mxu0 0.0
    %2001 = vmatprep.subr.mxu0 0.0
    %2002 = vmatpush1.msra.mxu0 0.0
    %2003 = vmatprep.subr.mxu0 0.0
    %2004 = vmatpush1.msra.mxu0 0.0
    %2005 = vmatprep.subr.mxu0 0.0
    %2006 = vmatpush1.msra.mxu0 0.0
    %2007 = vmatprep.subr.mxu0 0.0
    %2008 = vmatpush1.msra.mxu0 0.0
    %2009 = vmatprep.subr.mxu0 0.0
    %2010 = vmatpush1.msra.mxu0 0.0
    %2011 = vmatprep.subr.mxu0 0.0
    %2012 = vmatpush1.msra.mxu0 0.0
    %2013 = vmatprep.subr.mxu0 0.0
    %2014 = vmatpush1.msra.mxu0 0.0
    %2015 = vmatprep.subr.mxu0 0.0
    %2016 = vmatpush1.msra.mxu0 0.0
    %2017 = vmatprep.subr.mxu0 0.0
    %2018 = vmatpush1.msra.mxu0 0.0
    %2019 = vmatprep.subr.mxu0 0.0
    %2020 = vmatpush1.msra.mxu0 0.0
    %2021 = vmatprep.subr.mxu0 0.0
    %2022 = vmatpush1.msra.mxu0 0.0
    %2023 = vmatprep.subr.mxu0 0.0
    %2024 = vmatpush1.msra.mxu0 0.0
    %2025 = vmatprep.subr.mxu0 0.0
    %2026 = vmatpush1.msra.mxu0 0.0
    %2027 = vmatprep.subr.mxu0 0.0
    %2028 = vmatpush1.msra.mxu0 0.0
    %2029 = vmatprep.subr.mxu0 0.0
    %2030 = vmatpush1.msra.mxu0 0.0
    %2031 = vmatprep.mubr.f32.mxu0 0.0
    %2032 = vmatmul.mubr.f32.gmra.mrb[0].mxu0 %v1965
    %v2033 = vpop.f32.mrb[0].mxu0
    %v2034 = vadd.f32 %v306, %v2033
    %v2035 = vpop.f32.mrb[0].mxu0
    %2036 = vdwg.mxu0
    %v2037 = vadd.f32 %v2034, %v1928
    %v2038 = vxor.u32 %v2037, 2147483648
    %v2039 = vmul.f32 %v2038, 1.442695
    %v2040 = vpow.pop %v2039
    %v2041 = vadd.f32 %v2040, 1.0
    %v2042 = vrcp.pop %v2041
    %v2043 = vmul.f32 1.0, %v2042
    %2045 = vrot.lane.b32.xlu0 %v1928, 64
    %v2046 = vpop.permute.xlu0 %2045
    %v2048 = vmul.f32 %v2043, %v2046
    %2050 = vrot.lane.b32.xlu0 %v2048, 64
    %v2051 = vpop.permute.xlu0 %2050
    %v2053 = vadd.f32 %v2034, %v2051
    %v2054 = vtanh.pop %v2053
    %v2055 = vsub.f32 1.0, %v2043
    %2057 = vrot.lane.b32.xlu0 %v2054, 96
    %v2058 = vpop.permute.xlu0 %2057
    %v2060 = vmul.f32 %v2055, %v2058
    %v2061 = vmul.f32 %v2043, %v1853
    %v2062 = vadd.f32 %v2060, %v2061
    %2064 = vrot.lane.b32.xlu0 %v2062, 96
    %v2065 = vpop.permute.xlu0 %2064
    %2067 = vst.msk [vmem:[#allocation2 + $0x7] sm:$0x1] %vm597, %v2065
    %v2068 = vld [vmem:[#allocation2] sm:$0xff]
    %v2069 = vld [vmem:[#allocation6 + $0x130] sm:$0xff]
    %v2070 = vld [vmem:[#allocation6 + $0x140] sm:$0xff]
    %v2071 = vld [vmem:[#allocation6 + $0x150] sm:$0xff]
    %v2072 = vld [vmem:[#allocation6 + $0x160] sm:$0xff]
    %v2074 = vsel %vm146, %v2068, 0
    %2076 = vmatprep.subr.mxu0 0.0
    %2077 = vmatpush1.msra.mxu0 %v2069
    %2078 = vmatprep.subr.mxu0 0.0
    %2079 = vmatpush1.msra.mxu0 %v2070
    %2080 = vmatprep.subr.mxu0 0.0
    %2081 = vmatpush1.msra.mxu0 %v2071
    %2082 = vmatprep.subr.mxu0 0.0
    %2083 = vmatpush1.msra.mxu0 %v2072
    %2084 = vmatprep.subr.mxu0 0.0
    %2085 = vmatpush1.msra.mxu0 0.0
    %2086 = vmatprep.subr.mxu0 0.0
    %2087 = vmatpush1.msra.mxu0 0.0
    %2088 = vmatprep.subr.mxu0 0.0
    %2089 = vmatpush1.msra.mxu0 0.0
    %2090 = vmatprep.subr.mxu0 0.0
    %2091 = vmatpush1.msra.mxu0 0.0
    %2092 = vmatprep.subr.mxu0 0.0
    %2093 = vmatpush1.msra.mxu0 0.0
    %2094 = vmatprep.subr.mxu0 0.0
    %2095 = vmatpush1.msra.mxu0 0.0
    %2096 = vmatprep.subr.mxu0 0.0
    %2097 = vmatpush1.msra.mxu0 0.0
    %2098 = vmatprep.subr.mxu0 0.0
    %2099 = vmatpush1.msra.mxu0 0.0
    %2100 = vmatprep.subr.mxu0 0.0
    %2101 = vmatpush1.msra.mxu0 0.0
    %2102 = vmatprep.subr.mxu0 0.0
    %2103 = vmatpush1.msra.mxu0 0.0
    %2104 = vmatprep.subr.mxu0 0.0
    %2105 = vmatpush1.msra.mxu0 0.0
    %2106 = vmatprep.subr.mxu0 0.0
    %2107 = vmatpush1.msra.mxu0 0.0
    %2108 = vmatprep.subr.mxu0 0.0
    %2109 = vmatpush1.msra.mxu0 0.0
    %2110 = vmatprep.subr.mxu0 0.0
    %2111 = vmatpush1.msra.mxu0 0.0
    %2112 = vmatprep.subr.mxu0 0.0
    %2113 = vmatpush1.msra.mxu0 0.0
    %2114 = vmatprep.subr.mxu0 0.0
    %2115 = vmatpush1.msra.mxu0 0.0
    %2116 = vmatprep.subr.mxu0 0.0
    %2117 = vmatpush1.msra.mxu0 0.0
    %2118 = vmatprep.subr.mxu0 0.0
    %2119 = vmatpush1.msra.mxu0 0.0
    %2120 = vmatprep.subr.mxu0 0.0
    %2121 = vmatpush1.msra.mxu0 0.0
    %2122 = vmatprep.subr.mxu0 0.0
    %2123 = vmatpush1.msra.mxu0 0.0
    %2124 = vmatprep.subr.mxu0 0.0
    %2125 = vmatpush1.msra.mxu0 0.0
    %2126 = vmatprep.subr.mxu0 0.0
    %2127 = vmatpush1.msra.mxu0 0.0
    %2128 = vmatprep.subr.mxu0 0.0
    %2129 = vmatpush1.msra.mxu0 0.0
    %2130 = vmatprep.subr.mxu0 0.0
    %2131 = vmatpush1.msra.mxu0 0.0
    %2132 = vmatprep.subr.mxu0 0.0
    %2133 = vmatpush1.msra.mxu0 0.0
    %2134 = vmatprep.subr.mxu0 0.0
    %2135 = vmatpush1.msra.mxu0 0.0
    %2136 = vmatprep.subr.mxu0 0.0
    %2137 = vmatpush1.msra.mxu0 0.0
    %2138 = vmatprep.subr.mxu0 0.0
    %2139 = vmatpush1.msra.mxu0 0.0
    %2140 = vmatprep.mubr.f32.mxu0 0.0
    %2141 = vmatmul.mubr.f32.gmra.mrb[0].mxu0 %v2074
    %v2142 = vpop.f32.mrb[0].mxu0
    %v2143 = vadd.f32 %v49, %v2142
    %v2144 = vpop.f32.mrb[0].mxu0
    %2145 = vdwg.mxu0
    %v2146 = vtanh.pop %v2143
    %2147 = vst [vmem:[%s3] sm:$0xff] %v2146
    %v2149 = vrot.slane %v2062, 7
    %vm2151 = vcmask 1040384
    %v2152 = vsel %vm2151, %v1962, %v2149
    %2154 = vrot.lane.b32.xlu0 %v2152, 96
    %v2155 = vpop.permute.xlu0 %2154
    %vm2157 = vcmask 254976
    %2158 = vst.msk [vmem:[#allocation8] sm:$0x3] %vm2157, %v2155
    // Predicated region
    $region22: #{rnn_actor_forward.1} parent=1 // pred_check
      _
    $region23: #{rnn_actor_forward.1} parent=1 // pred_check_branch
      %2160 = sbr.rel (0) target = $region25
    $region24: #{rnn_actor_forward.1} parent=1 // pred_region
      _
    $region25: #{rnn_actor_forward.1} parent=1 // pred_fallthru
      _
    // Predicated region
    $region26: #{rnn_actor_forward.1} parent=1 // pred_check
      _
    $region27: #{rnn_actor_forward.1} parent=1 // pred_check_branch
      %2162 = sbr.rel (0) target = $region29
    $region28: #{rnn_actor_forward.1} parent=1 // pred_region
      %s2164 = ssub.s32 32, 32
      %2165 = vsyncadd [#allocation5], %s2164
      %s2167 = sshll.u32 [#allocation8], 4
      %s2168 = int_to_ptr.vmem [resolvable:$true] %s2167
      %2170 = dma.vmem_to_hbm [thread:$0]  %s2168, 32, %s4, [#allocation5]
    $region29: #{rnn_actor_forward.1} parent=1 // pred_fallthru
      _
    // Predicated region
    $region30: #{rnn_actor_forward.1} parent=1 // pred_check
      _
    $region31: #{rnn_actor_forward.1} parent=1 // pred_check_branch
      %2172 = sbr.rel (0) target = $region33
    $region32: #{rnn_actor_forward.1} parent=1 // pred_region
      _
    $region33: #{rnn_actor_forward.1} parent=1 // pred_fallthru
      _
    // Predicated region
    $region34: #{rnn_actor_forward.1} parent=1 // pred_check
      _
    $region35: #{rnn_actor_forward.1} parent=1 // pred_check_branch
      %2174 = sbr.rel (0) target = $region37
    $region36: #{rnn_actor_forward.1} parent=1 // pred_region
      %2175 = dma.done [#allocation5], 32
    $region37: #{rnn_actor_forward.1} parent=1 // pred_fallthru
      _
    %2176 = vsyncpa [#allocation4], 1
    %2177 = vsyncpa [#allocation7], 1
    %2178 = vsyncpa [#allocation5], 1

</llo_original>
